<compile_context>
chip_gen: v5e
topology: v5e:2x2
jax: 0.10.0
libtpu: 0.0.40
codegen_flags: <defaults>
</compile_context>

<pallas_src>
import functools

import jax
import jax.numpy as jnp
import numpy as np
from jax import lax
from jax.experimental import pallas as pl
from jax.experimental.pallas import tpu as pltpu

POSE_DIM = 34
H_DIM = 16


def lstm_seq2seq_kernel(xproj_e_ref,   # (seq, batch, 4h)  obs @ W_ih_e + b_e
                        whh_e_ref,     # (h, 4h)
                        whh_d_ref,     # (h, 4h)
                        g0_d_ref,      # (batch, 4h)       obs[-1] @ W_ih_d + b_d
                        w_comb_ref,    # (h, 4h)           W_hh_d + W_fc @ W_ih_d
                        b_comb_ref,    # (batch, 4h)       b_d + b_fc @ W_ih_d
                        w_fc_ref,      # (h, pose)
                        b_fc_ref,      # (pred_len*batch, pose)
                        pred_ref,      # (pred_len*batch, pose)  output slab
                        h_all_ref):    # scratch: (pred_len*batch, h)
    seq_len, batch, _ = xproj_e_ref.shape
    h_dim = w_fc_ref.shape[0]
    pred_len = pred_ref.shape[0] // batch

    # Hoist all weight / bias loads out of the loops (stay vreg/VMEM resident).
    whh_e = whh_e_ref[...]
    whh_d = whh_d_ref[...]
    w_comb = w_comb_ref[...]
    b_comb = b_comb_ref[...]

    def apply_gates(gates, c):
        # Gate layout is (i, f, o | g). sigmoid(x) == 0.5*tanh(0.5*x)+0.5, so
        # each step issues exactly two serial EUP pushes here (one tanh over
        # the 3h-lane i/f/o slice, one over g) instead of exp+divide chains.
        ifo = 0.5 * jnp.tanh(0.5 * gates[:, :3 * h_dim]) + 0.5
        g = jnp.tanh(gates[:, 3 * h_dim:])
        i = ifo[:, :h_dim]
        f = ifo[:, h_dim:2 * h_dim]
        o = ifo[:, 2 * h_dim:]
        c_new = f * c + i * g
        h_new = o * jnp.tanh(c_new)
        return h_new, c_new

    h0 = jnp.zeros((batch, h_dim), jnp.float32)
    c0 = jnp.zeros((batch, h_dim), jnp.float32)

    # ----- encoder: input projection precomputed -> one recurrent dot / step --
    def enc_body(t, carry):
        h, c = carry
        gates = xproj_e_ref[t] + jnp.dot(
            h, whh_e, preferred_element_type=jnp.float32)
        return apply_gates(gates, c)

    h, c = lax.fori_loop(0, seq_len, enc_body, (h0, c0), unroll=True)

    # ----- decoder step 0: x_0 = obs[-1], its projection is precomputed ------
    gates0 = g0_d_ref[...] + jnp.dot(
        h, whh_d, preferred_element_type=jnp.float32)
    h, c = apply_gates(gates0, c)
    h_all_ref[0:batch, :] = h          # off the h->h chain

    # ----- decoder steps 1..pred_len-1: fc feedback folded into recurrence ---
    # x_t @ W_ih_d + h @ W_hh_d + b_d == h @ W_comb + b_comb   (for t >= 1)
    # Trace-time Python loop; all h-scratch store offsets are static.
    for t in range(1, pred_len):
        gates = jnp.dot(h, w_comb, preferred_element_type=jnp.float32) + b_comb
        h, c = apply_gates(gates, c)
        h_all_ref[t * batch:(t + 1) * batch, :] = h   # off the h->h chain

    # ----- deferred FC head: ONE batched dot + ONE lane/tile-dense store -----
    pred_ref[...] = (jnp.dot(h_all_ref[...], w_fc_ref[...],
                             preferred_element_type=jnp.float32)
                     + b_fc_ref[...])


def _reorder_gates(x, h_dim):
    """Permute the last 4h axis from (i, f, g, o) to (i, f, o, g)."""
    return jnp.concatenate(
        [x[..., :2 * h_dim], x[..., 3 * h_dim:], x[..., 2 * h_dim:3 * h_dim]],
        axis=-1)


@functools.partial(jax.jit, static_argnames=("pred_len",))
def lstm_forward(obs_s, params, pred_len=15):
    seq_len, batch, l = obs_s.shape
    assert l == POSE_DIM
    assert seq_len >= 1 and pred_len >= 1
    h_dim = params["w_hh_e"].shape[0]
    hp = jax.lax.Precision.HIGHEST  # one-time prep dots kept exact-ish

    obs_f32 = obs_s.astype(jnp.float32)

    # ----- one-time layout prep (gate reorder, fusion, bias broadcast) -----
    wih_e = _reorder_gates(params["w_ih_e"], h_dim)          # (pose, 4h)
    whh_e = _reorder_gates(params["w_hh_e"], h_dim)          # (h, 4h)
    b_e = _reorder_gates(params["b_e"], h_dim)               # (1, 4h)
    wih_d = _reorder_gates(params["w_ih_d"], h_dim)          # (pose, 4h)
    whh_d = _reorder_gates(params["w_hh_d"], h_dim)          # (h, 4h)
    b_d = _reorder_gates(params["b_d"], h_dim)               # (1, 4h)
    w_fc = params["w_fc"]                                    # (h, pose)
    b_fc = params["b_fc"]                                    # (1, pose)

    # Encoder input projections for all timesteps (off the serial chain).
    xproj_e = jnp.dot(obs_f32, wih_e, precision=hp) + b_e    # (seq, batch, 4h)

    # Decoder step-0 input projection and folded recurrence weights.
    g0_d = jnp.dot(obs_f32[-1], wih_d, precision=hp) + b_d   # (batch, 4h)
    w_comb = whh_d + jnp.dot(w_fc, wih_d, precision=hp)      # (h, 4h)
    b_comb = jnp.broadcast_to(
        b_d + jnp.dot(b_fc, wih_d, precision=hp), (batch, 4 * h_dim))
    b_fc_b = jnp.broadcast_to(b_fc, (pred_len * batch, l))   # for deferred head

    vmem = pl.BlockSpec(memory_space=pltpu.MemorySpace.VMEM)

    # Everything (<100 KB) stays whole-array resident in VMEM: no grid/tiling.
    # Output is one lane/tile-dense slab; reshape to (pred_len, batch, pose)
    # in the wrapper (contiguous, free).
    out_flat = pl.pallas_call(
        lstm_seq2seq_kernel,
        out_shape=jax.ShapeDtypeStruct((pred_len * batch, l), jnp.float32),
        in_specs=[vmem] * 8,
        out_specs=vmem,
        scratch_shapes=[pltpu.VMEM((pred_len * batch, h_dim), jnp.float32)],
    )(xproj_e, whh_e, whh_d, g0_d, w_comb, b_comb, w_fc, b_fc_b)
    return out_flat.reshape(pred_len, batch, l)


def init_params(key, pose_dim=POSE_DIM, h_dim=H_DIM):
    """Deterministic init, PyTorch-style uniform(-1/sqrt(h), 1/sqrt(h))."""
    bound = 1.0 / np.sqrt(h_dim)
    ks = jax.random.split(key, 10)

    def u(k, shape):
        return jax.random.uniform(k, shape, jnp.float32, -bound, bound)

    # PyTorch stores W_ih as (4h, in), W_hh as (4h, h); we pre-transpose.
    # Gate order here is PyTorch's (i, f, g, o); reordering happens in the
    # wrapper, so these params match the reference exactly.
    return dict(
        w_ih_e=u(ks[0], (pose_dim, 4 * h_dim)),
        w_hh_e=u(ks[1], (h_dim, 4 * h_dim)),
        b_e=u(ks[2], (1, 4 * h_dim)) + u(ks[3], (1, 4 * h_dim)),  # b_ih + b_hh
        w_ih_d=u(ks[4], (pose_dim, 4 * h_dim)),
        w_hh_d=u(ks[5], (h_dim, 4 * h_dim)),
        b_d=u(ks[6], (1, 4 * h_dim)) + u(ks[7], (1, 4 * h_dim)),
        w_fc=u(ks[8], (h_dim, pose_dim)),
        b_fc=u(ks[9], (1, pose_dim)),
    )


def lstm_ref(obs, p, pred_len):
    """Pure-JAX reference of the same forward pass (literal module semantics)."""
    seq_len, batch, pose_dim = obs.shape
    h_dim = p["w_hh_e"].shape[0]
    hp = jax.lax.Precision.HIGHEST

    def cell(x, h, c, w_ih, w_hh, b):
        gates = (jnp.dot(x, w_ih, precision=hp)
                 + jnp.dot(h, w_hh, precision=hp) + b)
        i = jax.nn.sigmoid(gates[:, :h_dim])
        f = jax.nn.sigmoid(gates[:, h_dim:2 * h_dim])
        g = jnp.tanh(gates[:, 2 * h_dim:3 * h_dim])
        o = jax.nn.sigmoid(gates[:, 3 * h_dim:])
        c = f * c + i * g
        h = o * jnp.tanh(c)
        return h, c

    h = jnp.zeros((batch, h_dim), jnp.float32)
    c = jnp.zeros((batch, h_dim), jnp.float32)
    for t in range(seq_len):
        h, c = cell(obs[t], h, c, p["w_ih_e"], p["w_hh_e"], p["b_e"])
    x = obs[-1]
    preds = []
    for _ in range(pred_len):
        h, c = cell(x, h, c, p["w_ih_d"], p["w_hh_d"], p["b_d"])
        x = jnp.dot(h, p["w_fc"], precision=hp) + p["b_fc"]
        preds.append(x)
    return jnp.stack(preds, axis=0)


if __name__ == "__main__":
    key = jax.random.PRNGKey(0)
    k_obs, k_par = jax.random.split(key)

    seq_len, batch, pred_len = 8, 2, 15
    obs_s = jax.random.normal(k_obs, (seq_len, batch, POSE_DIM), jnp.float32)
    params = init_params(k_par)

    out = lstm_forward(obs_s, params, pred_len=pred_len)
    out = jax.block_until_ready(out)

    ref = jax.block_until_ready(lstm_ref(obs_s, params, pred_len))
    # Tolerance 2e-2: in-kernel dots run at default MXU precision (bf16
    # passes), reference uses HIGHEST; folded recurrence compounds rounding
    # over pred_len serial steps.
    np.testing.assert_allclose(np.asarray(out), np.asarray(ref),
                               rtol=2e-2, atol=2e-2)
    assert out.shape == (pred_len, batch, POSE_DIM)

    print("KERNEL_OK")
</pallas_src>

<mosaic_0001>
module attributes {stable_mosaic.version = 11 : i64} {
  func.func @lstm_seq2seq_kernel(%arg0: memref<8x2x64xf32, #tpu.memory_space<vmem>>, %arg1: memref<16x64xf32, #tpu.memory_space<vmem>>, %arg2: memref<16x64xf32, #tpu.memory_space<vmem>>, %arg3: memref<2x64xf32, #tpu.memory_space<vmem>>, %arg4: memref<16x64xf32, #tpu.memory_space<vmem>>, %arg5: memref<2x64xf32, #tpu.memory_space<vmem>>, %arg6: memref<16x34xf32, #tpu.memory_space<vmem>>, %arg7: memref<30x34xf32, #tpu.memory_space<vmem>>, %arg8: memref<30x34xf32, #tpu.memory_space<vmem>>, %arg9: memref<30x16xf32, #tpu.memory_space<vmem>>) attributes {dimension_semantics = [], scalar_prefetch = 0 : i64, scratch_operands = 1 : i64, tpu.core_type = #tpu.core_type<tc>} {
    %c0 = arith.constant 0 : index
    %c0_0 = arith.constant 0 : index
    %0 = vector.load %arg1[%c0, %c0_0] : memref<16x64xf32, #tpu.memory_space<vmem>>, vector<16x64xf32>
    %c0_1 = arith.constant 0 : index
    %c0_2 = arith.constant 0 : index
    %1 = vector.load %arg2[%c0_1, %c0_2] : memref<16x64xf32, #tpu.memory_space<vmem>>, vector<16x64xf32>
    %c0_3 = arith.constant 0 : index
    %c0_4 = arith.constant 0 : index
    %2 = vector.load %arg4[%c0_3, %c0_4] : memref<16x64xf32, #tpu.memory_space<vmem>>, vector<16x64xf32>
    %c0_5 = arith.constant 0 : index
    %c0_6 = arith.constant 0 : index
    %3 = vector.load %arg5[%c0_5, %c0_6] : memref<2x64xf32, #tpu.memory_space<vmem>>, vector<2x64xf32>
    %cst = arith.constant 0.000000e+00 : f32
    %4 = vector.broadcast %cst : f32 to vector<2x16xf32>
    %cst_7 = arith.constant 0.000000e+00 : f32
    %5 = vector.broadcast %cst_7 : f32 to vector<2x16xf32>
    %c0_i32 = arith.constant 0 : i32
    %6 = arith.index_cast %c0_i32 : i32 to index
    %c0_8 = arith.constant 0 : index
    %c0_9 = arith.constant 0 : index
    %7 = vector.load %arg0[%6, %c0_8, %c0_9] : memref<8x2x64xf32, #tpu.memory_space<vmem>>, vector<1x2x64xf32>
    %8 = vector.shape_cast %7 : vector<1x2x64xf32> to vector<2x64xf32>
    %cst_10 = arith.constant dense<0.000000e+00> : vector<2x64xf32>
    %9 = tpu.matmul %4, %0, %cst_10 {dimension_numbers = #tpu.dot_dimension_numbers<[1], [0], [0], [1], [0, 0, 1, 1], [], []>} : vector<2x16xf32>, vector<16x64xf32>, vector<2x64xf32> -> vector<2x64xf32>
    %10 = arith.addf %8, %9 : vector<2x64xf32>
    %11 = vector.extract_strided_slice %10 {offsets = [0, 0], sizes = [2, 48], strides = [1, 1]} : vector<2x64xf32> to vector<2x48xf32>
    %cst_11 = arith.constant 5.000000e-01 : f32
    %12 = vector.broadcast %cst_11 : f32 to vector<2x48xf32>
    %13 = arith.mulf %12, %11 : vector<2x48xf32>
    %14 = math.tanh %13 : vector<2x48xf32>
    %cst_12 = arith.constant 5.000000e-01 : f32
    %15 = vector.broadcast %cst_12 : f32 to vector<2x48xf32>
    %16 = arith.mulf %15, %14 : vector<2x48xf32>
    %cst_13 = arith.constant 5.000000e-01 : f32
    %17 = vector.broadcast %cst_13 : f32 to vector<2x48xf32>
    %18 = arith.addf %16, %17 : vector<2x48xf32>
    %19 = vector.extract_strided_slice %10 {offsets = [0, 48], sizes = [2, 16], strides = [1, 1]} : vector<2x64xf32> to vector<2x16xf32>
    %20 = math.tanh %19 : vector<2x16xf32>
    %21 = vector.extract_strided_slice %18 {offsets = [0, 0], sizes = [2, 16], strides = [1, 1]} : vector<2x48xf32> to vector<2x16xf32>
    %22 = vector.extract_strided_slice %18 {offsets = [0, 16], sizes = [2, 16], strides = [1, 1]} : vector<2x48xf32> to vector<2x16xf32>
    %23 = vector.extract_strided_slice %18 {offsets = [0, 32], sizes = [2, 16], strides = [1, 1]} : vector<2x48xf32> to vector<2x16xf32>
    %24 = arith.mulf %22, %5 : vector<2x16xf32>
    %25 = arith.mulf %21, %20 : vector<2x16xf32>
    %26 = arith.addf %24, %25 : vector<2x16xf32>
    %27 = math.tanh %26 : vector<2x16xf32>
    %28 = arith.mulf %23, %27 : vector<2x16xf32>
    %c1_i32 = arith.constant 1 : i32
    %29 = arith.index_cast %c1_i32 : i32 to index
    %c0_14 = arith.constant 0 : index
    %c0_15 = arith.constant 0 : index
    %30 = vector.load %arg0[%29, %c0_14, %c0_15] : memref<8x2x64xf32, #tpu.memory_space<vmem>>, vector<1x2x64xf32>
    %31 = vector.shape_cast %30 : vector<1x2x64xf32> to vector<2x64xf32>
    %cst_16 = arith.constant dense<0.000000e+00> : vector<2x64xf32>
    %32 = tpu.matmul %28, %0, %cst_16 {dimension_numbers = #tpu.dot_dimension_numbers<[1], [0], [0], [1], [0, 0, 1, 1], [], []>} : vector<2x16xf32>, vector<16x64xf32>, vector<2x64xf32> -> vector<2x64xf32>
    %33 = arith.addf %31, %32 : vector<2x64xf32>
    %34 = vector.extract_strided_slice %33 {offsets = [0, 0], sizes = [2, 48], strides = [1, 1]} : vector<2x64xf32> to vector<2x48xf32>
    %cst_17 = arith.constant 5.000000e-01 : f32
    %35 = vector.broadcast %cst_17 : f32 to vector<2x48xf32>
    %36 = arith.mulf %35, %34 : vector<2x48xf32>
    %37 = math.tanh %36 : vector<2x48xf32>
    %cst_18 = arith.constant 5.000000e-01 : f32
    %38 = vector.broadcast %cst_18 : f32 to vector<2x48xf32>
    %39 = arith.mulf %38, %37 : vector<2x48xf32>
    %cst_19 = arith.constant 5.000000e-01 : f32
    %40 = vector.broadcast %cst_19 : f32 to vector<2x48xf32>
    %41 = arith.addf %39, %40 : vector<2x48xf32>
    %42 = vector.extract_strided_slice %33 {offsets = [0, 48], sizes = [2, 16], strides = [1, 1]} : vector<2x64xf32> to vector<2x16xf32>
    %43 = math.tanh %42 : vector<2x16xf32>
    %44 = vector.extract_strided_slice %41 {offsets = [0, 0], sizes = [2, 16], strides = [1, 1]} : vector<2x48xf32> to vector<2x16xf32>
    %45 = vector.extract_strided_slice %41 {offsets = [0, 16], sizes = [2, 16], strides = [1, 1]} : vector<2x48xf32> to vector<2x16xf32>
    %46 = vector.extract_strided_slice %41 {offsets = [0, 32], sizes = [2, 16], strides = [1, 1]} : vector<2x48xf32> to vector<2x16xf32>
    %47 = arith.mulf %45, %26 : vector<2x16xf32>
    %48 = arith.mulf %44, %43 : vector<2x16xf32>
    %49 = arith.addf %47, %48 : vector<2x16xf32>
    %50 = math.tanh %49 : vector<2x16xf32>
    %51 = arith.mulf %46, %50 : vector<2x16xf32>
    %c2_i32 = arith.constant 2 : i32
    %52 = arith.index_cast %c2_i32 : i32 to index
    %c0_20 = arith.constant 0 : index
    %c0_21 = arith.constant 0 : index
    %53 = vector.load %arg0[%52, %c0_20, %c0_21] : memref<8x2x64xf32, #tpu.memory_space<vmem>>, vector<1x2x64xf32>
    %54 = vector.shape_cast %53 : vector<1x2x64xf32> to vector<2x64xf32>
    %cst_22 = arith.constant dense<0.000000e+00> : vector<2x64xf32>
    %55 = tpu.matmul %51, %0, %cst_22 {dimension_numbers = #tpu.dot_dimension_numbers<[1], [0], [0], [1], [0, 0, 1, 1], [], []>} : vector<2x16xf32>, vector<16x64xf32>, vector<2x64xf32> -> vector<2x64xf32>
    %56 = arith.addf %54, %55 : vector<2x64xf32>
    %57 = vector.extract_strided_slice %56 {offsets = [0, 0], sizes = [2, 48], strides = [1, 1]} : vector<2x64xf32> to vector<2x48xf32>
    %cst_23 = arith.constant 5.000000e-01 : f32
    %58 = vector.broadcast %cst_23 : f32 to vector<2x48xf32>
    %59 = arith.mulf %58, %57 : vector<2x48xf32>
    %60 = math.tanh %59 : vector<2x48xf32>
    %cst_24 = arith.constant 5.000000e-01 : f32
    %61 = vector.broadcast %cst_24 : f32 to vector<2x48xf32>
    %62 = arith.mulf %61, %60 : vector<2x48xf32>
    %cst_25 = arith.constant 5.000000e-01 : f32
    %63 = vector.broadcast %cst_25 : f32 to vector<2x48xf32>
    %64 = arith.addf %62, %63 : vector<2x48xf32>
    %65 = vector.extract_strided_slice %56 {offsets = [0, 48], sizes = [2, 16], strides = [1, 1]} : vector<2x64xf32> to vector<2x16xf32>
    %66 = math.tanh %65 : vector<2x16xf32>
    %67 = vector.extract_strided_slice %64 {offsets = [0, 0], sizes = [2, 16], strides = [1, 1]} : vector<2x48xf32> to vector<2x16xf32>
    %68 = vector.extract_strided_slice %64 {offsets = [0, 16], sizes = [2, 16], strides = [1, 1]} : vector<2x48xf32> to vector<2x16xf32>
    %69 = vector.extract_strided_slice %64 {offsets = [0, 32], sizes = [2, 16], strides = [1, 1]} : vector<2x48xf32> to vector<2x16xf32>
    %70 = arith.mulf %68, %49 : vector<2x16xf32>
    %71 = arith.mulf %67, %66 : vector<2x16xf32>
    %72 = arith.addf %70, %71 : vector<2x16xf32>
    %73 = math.tanh %72 : vector<2x16xf32>
    %74 = arith.mulf %69, %73 : vector<2x16xf32>
    %c3_i32 = arith.constant 3 : i32
    %75 = arith.index_cast %c3_i32 : i32 to index
    %c0_26 = arith.constant 0 : index
    %c0_27 = arith.constant 0 : index
    %76 = vector.load %arg0[%75, %c0_26, %c0_27] : memref<8x2x64xf32, #tpu.memory_space<vmem>>, vector<1x2x64xf32>
    %77 = vector.shape_cast %76 : vector<1x2x64xf32> to vector<2x64xf32>
    %cst_28 = arith.constant dense<0.000000e+00> : vector<2x64xf32>
    %78 = tpu.matmul %74, %0, %cst_28 {dimension_numbers = #tpu.dot_dimension_numbers<[1], [0], [0], [1], [0, 0, 1, 1], [], []>} : vector<2x16xf32>, vector<16x64xf32>, vector<2x64xf32> -> vector<2x64xf32>
    %79 = arith.addf %77, %78 : vector<2x64xf32>
    %80 = vector.extract_strided_slice %79 {offsets = [0, 0], sizes = [2, 48], strides = [1, 1]} : vector<2x64xf32> to vector<2x48xf32>
    %cst_29 = arith.constant 5.000000e-01 : f32
    %81 = vector.broadcast %cst_29 : f32 to vector<2x48xf32>
    %82 = arith.mulf %81, %80 : vector<2x48xf32>
    %83 = math.tanh %82 : vector<2x48xf32>
    %cst_30 = arith.constant 5.000000e-01 : f32
    %84 = vector.broadcast %cst_30 : f32 to vector<2x48xf32>
    %85 = arith.mulf %84, %83 : vector<2x48xf32>
    %cst_31 = arith.constant 5.000000e-01 : f32
    %86 = vector.broadcast %cst_31 : f32 to vector<2x48xf32>
    %87 = arith.addf %85, %86 : vector<2x48xf32>
    %88 = vector.extract_strided_slice %79 {offsets = [0, 48], sizes = [2, 16], strides = [1, 1]} : vector<2x64xf32> to vector<2x16xf32>
    %89 = math.tanh %88 : vector<2x16xf32>
    %90 = vector.extract_strided_slice %87 {offsets = [0, 0], sizes = [2, 16], strides = [1, 1]} : vector<2x48xf32> to vector<2x16xf32>
    %91 = vector.extract_strided_slice %87 {offsets = [0, 16], sizes = [2, 16], strides = [1, 1]} : vector<2x48xf32> to vector<2x16xf32>
    %92 = vector.extract_strided_slice %87 {offsets = [0, 32], sizes = [2, 16], strides = [1, 1]} : vector<2x48xf32> to vector<2x16xf32>
    %93 = arith.mulf %91, %72 : vector<2x16xf32>
    %94 = arith.mulf %90, %89 : vector<2x16xf32>
    %95 = arith.addf %93, %94 : vector<2x16xf32>
    %96 = math.tanh %95 : vector<2x16xf32>
    %97 = arith.mulf %92, %96 : vector<2x16xf32>
    %c4_i32 = arith.constant 4 : i32
    %98 = arith.index_cast %c4_i32 : i32 to index
    %c0_32 = arith.constant 0 : index
    %c0_33 = arith.constant 0 : index
    %99 = vector.load %arg0[%98, %c0_32, %c0_33] : memref<8x2x64xf32, #tpu.memory_space<vmem>>, vector<1x2x64xf32>
    %100 = vector.shape_cast %99 : vector<1x2x64xf32> to vector<2x64xf32>
    %cst_34 = arith.constant dense<0.000000e+00> : vector<2x64xf32>
    %101 = tpu.matmul %97, %0, %cst_34 {dimension_numbers = #tpu.dot_dimension_numbers<[1], [0], [0], [1], [0, 0, 1, 1], [], []>} : vector<2x16xf32>, vector<16x64xf32>, vector<2x64xf32> -> vector<2x64xf32>
    %102 = arith.addf %100, %101 : vector<2x64xf32>
    %103 = vector.extract_strided_slice %102 {offsets = [0, 0], sizes = [2, 48], strides = [1, 1]} : vector<2x64xf32> to vector<2x48xf32>
    %cst_35 = arith.constant 5.000000e-01 : f32
    %104 = vector.broadcast %cst_35 : f32 to vector<2x48xf32>
    %105 = arith.mulf %104, %103 : vector<2x48xf32>
    %106 = math.tanh %105 : vector<2x48xf32>
    %cst_36 = arith.constant 5.000000e-01 : f32
    %107 = vector.broadcast %cst_36 : f32 to vector<2x48xf32>
    %108 = arith.mulf %107, %106 : vector<2x48xf32>
    %cst_37 = arith.constant 5.000000e-01 : f32
    %109 = vector.broadcast %cst_37 : f32 to vector<2x48xf32>
    %110 = arith.addf %108, %109 : vector<2x48xf32>
    %111 = vector.extract_strided_slice %102 {offsets = [0, 48], sizes = [2, 16], strides = [1, 1]} : vector<2x64xf32> to vector<2x16xf32>
    %112 = math.tanh %111 : vector<2x16xf32>
    %113 = vector.extract_strided_slice %110 {offsets = [0, 0], sizes = [2, 16], strides = [1, 1]} : vector<2x48xf32> to vector<2x16xf32>
    %114 = vector.extract_strided_slice %110 {offsets = [0, 16], sizes = [2, 16], strides = [1, 1]} : vector<2x48xf32> to vector<2x16xf32>
    %115 = vector.extract_strided_slice %110 {offsets = [0, 32], sizes = [2, 16], strides = [1, 1]} : vector<2x48xf32> to vector<2x16xf32>
    %116 = arith.mulf %114, %95 : vector<2x16xf32>
    %117 = arith.mulf %113, %112 : vector<2x16xf32>
    %118 = arith.addf %116, %117 : vector<2x16xf32>
    %119 = math.tanh %118 : vector<2x16xf32>
    %120 = arith.mulf %115, %119 : vector<2x16xf32>
    %c5_i32 = arith.constant 5 : i32
    %121 = arith.index_cast %c5_i32 : i32 to index
    %c0_38 = arith.constant 0 : index
    %c0_39 = arith.constant 0 : index
    %122 = vector.load %arg0[%121, %c0_38, %c0_39] : memref<8x2x64xf32, #tpu.memory_space<vmem>>, vector<1x2x64xf32>
    %123 = vector.shape_cast %122 : vector<1x2x64xf32> to vector<2x64xf32>
    %cst_40 = arith.constant dense<0.000000e+00> : vector<2x64xf32>
    %124 = tpu.matmul %120, %0, %cst_40 {dimension_numbers = #tpu.dot_dimension_numbers<[1], [0], [0], [1], [0, 0, 1, 1], [], []>} : vector<2x16xf32>, vector<16x64xf32>, vector<2x64xf32> -> vector<2x64xf32>
    %125 = arith.addf %123, %124 : vector<2x64xf32>
    %126 = vector.extract_strided_slice %125 {offsets = [0, 0], sizes = [2, 48], strides = [1, 1]} : vector<2x64xf32> to vector<2x48xf32>
    %cst_41 = arith.constant 5.000000e-01 : f32
    %127 = vector.broadcast %cst_41 : f32 to vector<2x48xf32>
    %128 = arith.mulf %127, %126 : vector<2x48xf32>
    %129 = math.tanh %128 : vector<2x48xf32>
    %cst_42 = arith.constant 5.000000e-01 : f32
    %130 = vector.broadcast %cst_42 : f32 to vector<2x48xf32>
    %131 = arith.mulf %130, %129 : vector<2x48xf32>
    %cst_43 = arith.constant 5.000000e-01 : f32
    %132 = vector.broadcast %cst_43 : f32 to vector<2x48xf32>
    %133 = arith.addf %131, %132 : vector<2x48xf32>
    %134 = vector.extract_strided_slice %125 {offsets = [0, 48], sizes = [2, 16], strides = [1, 1]} : vector<2x64xf32> to vector<2x16xf32>
    %135 = math.tanh %134 : vector<2x16xf32>
    %136 = vector.extract_strided_slice %133 {offsets = [0, 0], sizes = [2, 16], strides = [1, 1]} : vector<2x48xf32> to vector<2x16xf32>
    %137 = vector.extract_strided_slice %133 {offsets = [0, 16], sizes = [2, 16], strides = [1, 1]} : vector<2x48xf32> to vector<2x16xf32>
    %138 = vector.extract_strided_slice %133 {offsets = [0, 32], sizes = [2, 16], strides = [1, 1]} : vector<2x48xf32> to vector<2x16xf32>
    %139 = arith.mulf %137, %118 : vector<2x16xf32>
    %140 = arith.mulf %136, %135 : vector<2x16xf32>
    %141 = arith.addf %139, %140 : vector<2x16xf32>
    %142 = math.tanh %141 : vector<2x16xf32>
    %143 = arith.mulf %138, %142 : vector<2x16xf32>
    %c6_i32 = arith.constant 6 : i32
    %144 = arith.index_cast %c6_i32 : i32 to index
    %c0_44 = arith.constant 0 : index
    %c0_45 = arith.constant 0 : index
    %145 = vector.load %arg0[%144, %c0_44, %c0_45] : memref<8x2x64xf32, #tpu.memory_space<vmem>>, vector<1x2x64xf32>
    %146 = vector.shape_cast %145 : vector<1x2x64xf32> to vector<2x64xf32>
    %cst_46 = arith.constant dense<0.000000e+00> : vector<2x64xf32>
    %147 = tpu.matmul %143, %0, %cst_46 {dimension_numbers = #tpu.dot_dimension_numbers<[1], [0], [0], [1], [0, 0, 1, 1], [], []>} : vector<2x16xf32>, vector<16x64xf32>, vector<2x64xf32> -> vector<2x64xf32>
    %148 = arith.addf %146, %147 : vector<2x64xf32>
    %149 = vector.extract_strided_slice %148 {offsets = [0, 0], sizes = [2, 48], strides = [1, 1]} : vector<2x64xf32> to vector<2x48xf32>
    %cst_47 = arith.constant 5.000000e-01 : f32
    %150 = vector.broadcast %cst_47 : f32 to vector<2x48xf32>
    %151 = arith.mulf %150, %149 : vector<2x48xf32>
    %152 = math.tanh %151 : vector<2x48xf32>
    %cst_48 = arith.constant 5.000000e-01 : f32
    %153 = vector.broadcast %cst_48 : f32 to vector<2x48xf32>
    %154 = arith.mulf %153, %152 : vector<2x48xf32>
    %cst_49 = arith.constant 5.000000e-01 : f32
    %155 = vector.broadcast %cst_49 : f32 to vector<2x48xf32>
    %156 = arith.addf %154, %155 : vector<2x48xf32>
    %157 = vector.extract_strided_slice %148 {offsets = [0, 48], sizes = [2, 16], strides = [1, 1]} : vector<2x64xf32> to vector<2x16xf32>
    %158 = math.tanh %157 : vector<2x16xf32>
    %159 = vector.extract_strided_slice %156 {offsets = [0, 0], sizes = [2, 16], strides = [1, 1]} : vector<2x48xf32> to vector<2x16xf32>
    %160 = vector.extract_strided_slice %156 {offsets = [0, 16], sizes = [2, 16], strides = [1, 1]} : vector<2x48xf32> to vector<2x16xf32>
    %161 = vector.extract_strided_slice %156 {offsets = [0, 32], sizes = [2, 16], strides = [1, 1]} : vector<2x48xf32> to vector<2x16xf32>
    %162 = arith.mulf %160, %141 : vector<2x16xf32>
    %163 = arith.mulf %159, %158 : vector<2x16xf32>
    %164 = arith.addf %162, %163 : vector<2x16xf32>
    %165 = math.tanh %164 : vector<2x16xf32>
    %166 = arith.mulf %161, %165 : vector<2x16xf32>
    %c7_i32 = arith.constant 7 : i32
    %167 = arith.index_cast %c7_i32 : i32 to index
    %c0_50 = arith.constant 0 : index
    %c0_51 = arith.constant 0 : index
    %168 = vector.load %arg0[%167, %c0_50, %c0_51] : memref<8x2x64xf32, #tpu.memory_space<vmem>>, vector<1x2x64xf32>
    %169 = vector.shape_cast %168 : vector<1x2x64xf32> to vector<2x64xf32>
    %cst_52 = arith.constant dense<0.000000e+00> : vector<2x64xf32>
    %170 = tpu.matmul %166, %0, %cst_52 {dimension_numbers = #tpu.dot_dimension_numbers<[1], [0], [0], [1], [0, 0, 1, 1], [], []>} : vector<2x16xf32>, vector<16x64xf32>, vector<2x64xf32> -> vector<2x64xf32>
    %171 = arith.addf %169, %170 : vector<2x64xf32>
    %172 = vector.extract_strided_slice %171 {offsets = [0, 0], sizes = [2, 48], strides = [1, 1]} : vector<2x64xf32> to vector<2x48xf32>
    %cst_53 = arith.constant 5.000000e-01 : f32
    %173 = vector.broadcast %cst_53 : f32 to vector<2x48xf32>
    %174 = arith.mulf %173, %172 : vector<2x48xf32>
    %175 = math.tanh %174 : vector<2x48xf32>
    %cst_54 = arith.constant 5.000000e-01 : f32
    %176 = vector.broadcast %cst_54 : f32 to vector<2x48xf32>
    %177 = arith.mulf %176, %175 : vector<2x48xf32>
    %cst_55 = arith.constant 5.000000e-01 : f32
    %178 = vector.broadcast %cst_55 : f32 to vector<2x48xf32>
    %179 = arith.addf %177, %178 : vector<2x48xf32>
    %180 = vector.extract_strided_slice %171 {offsets = [0, 48], sizes = [2, 16], strides = [1, 1]} : vector<2x64xf32> to vector<2x16xf32>
    %181 = math.tanh %180 : vector<2x16xf32>
    %182 = vector.extract_strided_slice %179 {offsets = [0, 0], sizes = [2, 16], strides = [1, 1]} : vector<2x48xf32> to vector<2x16xf32>
    %183 = vector.extract_strided_slice %179 {offsets = [0, 16], sizes = [2, 16], strides = [1, 1]} : vector<2x48xf32> to vector<2x16xf32>
    %184 = vector.extract_strided_slice %179 {offsets = [0, 32], sizes = [2, 16], strides = [1, 1]} : vector<2x48xf32> to vector<2x16xf32>
    %185 = arith.mulf %183, %164 : vector<2x16xf32>
    %186 = arith.mulf %182, %181 : vector<2x16xf32>
    %187 = arith.addf %185, %186 : vector<2x16xf32>
    %188 = math.tanh %187 : vector<2x16xf32>
    %189 = arith.mulf %184, %188 : vector<2x16xf32>
    %c8_i32 = arith.constant 8 : i32
    %c0_56 = arith.constant 0 : index
    %c0_57 = arith.constant 0 : index
    %190 = vector.load %arg3[%c0_56, %c0_57] : memref<2x64xf32, #tpu.memory_space<vmem>>, vector<2x64xf32>
    %cst_58 = arith.constant dense<0.000000e+00> : vector<2x64xf32>
    %191 = tpu.matmul %189, %1, %cst_58 {dimension_numbers = #tpu.dot_dimension_numbers<[1], [0], [0], [1], [0, 0, 1, 1], [], []>} : vector<2x16xf32>, vector<16x64xf32>, vector<2x64xf32> -> vector<2x64xf32>
    %192 = arith.addf %190, %191 : vector<2x64xf32>
    %193 = vector.extract_strided_slice %192 {offsets = [0, 0], sizes = [2, 48], strides = [1, 1]} : vector<2x64xf32> to vector<2x48xf32>
    %cst_59 = arith.constant 5.000000e-01 : f32
    %194 = vector.broadcast %cst_59 : f32 to vector<2x48xf32>
    %195 = arith.mulf %194, %193 : vector<2x48xf32>
    %196 = math.tanh %195 : vector<2x48xf32>
    %cst_60 = arith.constant 5.000000e-01 : f32
    %197 = vector.broadcast %cst_60 : f32 to vector<2x48xf32>
    %198 = arith.mulf %197, %196 : vector<2x48xf32>
    %cst_61 = arith.constant 5.000000e-01 : f32
    %199 = vector.broadcast %cst_61 : f32 to vector<2x48xf32>
    %200 = arith.addf %198, %199 : vector<2x48xf32>
    %201 = vector.extract_strided_slice %192 {offsets = [0, 48], sizes = [2, 16], strides = [1, 1]} : vector<2x64xf32> to vector<2x16xf32>
    %202 = math.tanh %201 : vector<2x16xf32>
    %203 = vector.extract_strided_slice %200 {offsets = [0, 0], sizes = [2, 16], strides = [1, 1]} : vector<2x48xf32> to vector<2x16xf32>
    %204 = vector.extract_strided_slice %200 {offsets = [0, 16], sizes = [2, 16], strides = [1, 1]} : vector<2x48xf32> to vector<2x16xf32>
    %205 = vector.extract_strided_slice %200 {offsets = [0, 32], sizes = [2, 16], strides = [1, 1]} : vector<2x48xf32> to vector<2x16xf32>
    %206 = arith.mulf %204, %187 : vector<2x16xf32>
    %207 = arith.mulf %203, %202 : vector<2x16xf32>
    %208 = arith.addf %206, %207 : vector<2x16xf32>
    %209 = math.tanh %208 : vector<2x16xf32>
    %210 = arith.mulf %205, %209 : vector<2x16xf32>
    %c0_62 = arith.constant 0 : index
    %c0_63 = arith.constant 0 : index
    %211 = vector.load %arg9[%c0_62, %c0_63] : memref<30x16xf32, #tpu.memory_space<vmem>>, vector<2x16xf32>
    tpu.vector_store %arg9[%c0_62, %c0_63], %210 {strides = array<i32>} : memref<30x16xf32, #tpu.memory_space<vmem>>, vector<2x16xf32>,
    %cst_64 = arith.constant dense<0.000000e+00> : vector<2x64xf32>
    %212 = tpu.matmul %210, %2, %cst_64 {dimension_numbers = #tpu.dot_dimension_numbers<[1], [0], [0], [1], [0, 0, 1, 1], [], []>} : vector<2x16xf32>, vector<16x64xf32>, vector<2x64xf32> -> vector<2x64xf32>
    %213 = arith.addf %212, %3 : vector<2x64xf32>
    %214 = vector.extract_strided_slice %213 {offsets = [0, 0], sizes = [2, 48], strides = [1, 1]} : vector<2x64xf32> to vector<2x48xf32>
    %cst_65 = arith.constant 5.000000e-01 : f32
    %215 = vector.broadcast %cst_65 : f32 to vector<2x48xf32>
    %216 = arith.mulf %215, %214 : vector<2x48xf32>
    %217 = math.tanh %216 : vector<2x48xf32>
    %cst_66 = arith.constant 5.000000e-01 : f32
    %218 = vector.broadcast %cst_66 : f32 to vector<2x48xf32>
    %219 = arith.mulf %218, %217 : vector<2x48xf32>
    %cst_67 = arith.constant 5.000000e-01 : f32
    %220 = vector.broadcast %cst_67 : f32 to vector<2x48xf32>
    %221 = arith.addf %219, %220 : vector<2x48xf32>
    %222 = vector.extract_strided_slice %213 {offsets = [0, 48], sizes = [2, 16], strides = [1, 1]} : vector<2x64xf32> to vector<2x16xf32>
    %223 = math.tanh %222 : vector<2x16xf32>
    %224 = vector.extract_strided_slice %221 {offsets = [0, 0], sizes = [2, 16], strides = [1, 1]} : vector<2x48xf32> to vector<2x16xf32>
    %225 = vector.extract_strided_slice %221 {offsets = [0, 16], sizes = [2, 16], strides = [1, 1]} : vector<2x48xf32> to vector<2x16xf32>
    %226 = vector.extract_strided_slice %221 {offsets = [0, 32], sizes = [2, 16], strides = [1, 1]} : vector<2x48xf32> to vector<2x16xf32>
    %227 = arith.mulf %225, %208 : vector<2x16xf32>
    %228 = arith.mulf %224, %223 : vector<2x16xf32>
    %229 = arith.addf %227, %228 : vector<2x16xf32>
    %230 = math.tanh %229 : vector<2x16xf32>
    %231 = arith.mulf %226, %230 : vector<2x16xf32>
    %c2 = arith.constant 2 : index
    %c0_68 = arith.constant 0 : index
    %232 = vector.load %arg9[%c2, %c0_68] : memref<30x16xf32, #tpu.memory_space<vmem>>, vector<2x16xf32>
    tpu.vector_store %arg9[%c2, %c0_68], %231 {strides = array<i32>} : memref<30x16xf32, #tpu.memory_space<vmem>>, vector<2x16xf32>,
    %cst_69 = arith.constant dense<0.000000e+00> : vector<2x64xf32>
    %233 = tpu.matmul %231, %2, %cst_69 {dimension_numbers = #tpu.dot_dimension_numbers<[1], [0], [0], [1], [0, 0, 1, 1], [], []>} : vector<2x16xf32>, vector<16x64xf32>, vector<2x64xf32> -> vector<2x64xf32>
    %234 = arith.addf %233, %3 : vector<2x64xf32>
    %235 = vector.extract_strided_slice %234 {offsets = [0, 0], sizes = [2, 48], strides = [1, 1]} : vector<2x64xf32> to vector<2x48xf32>
    %cst_70 = arith.constant 5.000000e-01 : f32
    %236 = vector.broadcast %cst_70 : f32 to vector<2x48xf32>
    %237 = arith.mulf %236, %235 : vector<2x48xf32>
    %238 = math.tanh %237 : vector<2x48xf32>
    %cst_71 = arith.constant 5.000000e-01 : f32
    %239 = vector.broadcast %cst_71 : f32 to vector<2x48xf32>
    %240 = arith.mulf %239, %238 : vector<2x48xf32>
    %cst_72 = arith.constant 5.000000e-01 : f32
    %241 = vector.broadcast %cst_72 : f32 to vector<2x48xf32>
    %242 = arith.addf %240, %241 : vector<2x48xf32>
    %243 = vector.extract_strided_slice %234 {offsets = [0, 48], sizes = [2, 16], strides = [1, 1]} : vector<2x64xf32> to vector<2x16xf32>
    %244 = math.tanh %243 : vector<2x16xf32>
    %245 = vector.extract_strided_slice %242 {offsets = [0, 0], sizes = [2, 16], strides = [1, 1]} : vector<2x48xf32> to vector<2x16xf32>
    %246 = vector.extract_strided_slice %242 {offsets = [0, 16], sizes = [2, 16], strides = [1, 1]} : vector<2x48xf32> to vector<2x16xf32>
    %247 = vector.extract_strided_slice %242 {offsets = [0, 32], sizes = [2, 16], strides = [1, 1]} : vector<2x48xf32> to vector<2x16xf32>
    %248 = arith.mulf %246, %229 : vector<2x16xf32>
    %249 = arith.mulf %245, %244 : vector<2x16xf32>
    %250 = arith.addf %248, %249 : vector<2x16xf32>
    %251 = math.tanh %250 : vector<2x16xf32>
    %252 = arith.mulf %247, %251 : vector<2x16xf32>
    %c4 = arith.constant 4 : index
    %c0_73 = arith.constant 0 : index
    %253 = vector.load %arg9[%c4, %c0_73] : memref<30x16xf32, #tpu.memory_space<vmem>>, vector<2x16xf32>
    tpu.vector_store %arg9[%c4, %c0_73], %252 {strides = array<i32>} : memref<30x16xf32, #tpu.memory_space<vmem>>, vector<2x16xf32>,
    %cst_74 = arith.constant dense<0.000000e+00> : vector<2x64xf32>
    %254 = tpu.matmul %252, %2, %cst_74 {dimension_numbers = #tpu.dot_dimension_numbers<[1], [0], [0], [1], [0, 0, 1, 1], [], []>} : vector<2x16xf32>, vector<16x64xf32>, vector<2x64xf32> -> vector<2x64xf32>
    %255 = arith.addf %254, %3 : vector<2x64xf32>
    %256 = vector.extract_strided_slice %255 {offsets = [0, 0], sizes = [2, 48], strides = [1, 1]} : vector<2x64xf32> to vector<2x48xf32>
    %cst_75 = arith.constant 5.000000e-01 : f32
    %257 = vector.broadcast %cst_75 : f32 to vector<2x48xf32>
    %258 = arith.mulf %257, %256 : vector<2x48xf32>
    %259 = math.tanh %258 : vector<2x48xf32>
    %cst_76 = arith.constant 5.000000e-01 : f32
    %260 = vector.broadcast %cst_76 : f32 to vector<2x48xf32>
    %261 = arith.mulf %260, %259 : vector<2x48xf32>
    %cst_77 = arith.constant 5.000000e-01 : f32
    %262 = vector.broadcast %cst_77 : f32 to vector<2x48xf32>
    %263 = arith.addf %261, %262 : vector<2x48xf32>
    %264 = vector.extract_strided_slice %255 {offsets = [0, 48], sizes = [2, 16], strides = [1, 1]} : vector<2x64xf32> to vector<2x16xf32>
    %265 = math.tanh %264 : vector<2x16xf32>
    %266 = vector.extract_strided_slice %263 {offsets = [0, 0], sizes = [2, 16], strides = [1, 1]} : vector<2x48xf32> to vector<2x16xf32>
    %267 = vector.extract_strided_slice %263 {offsets = [0, 16], sizes = [2, 16], strides = [1, 1]} : vector<2x48xf32> to vector<2x16xf32>
    %268 = vector.extract_strided_slice %263 {offsets = [0, 32], sizes = [2, 16], strides = [1, 1]} : vector<2x48xf32> to vector<2x16xf32>
    %269 = arith.mulf %267, %250 : vector<2x16xf32>
    %270 = arith.mulf %266, %265 : vector<2x16xf32>
    %271 = arith.addf %269, %270 : vector<2x16xf32>
    %272 = math.tanh %271 : vector<2x16xf32>
    %273 = arith.mulf %268, %272 : vector<2x16xf32>
    %c6 = arith.constant 6 : index
    %c0_78 = arith.constant 0 : index
    %274 = vector.load %arg9[%c6, %c0_78] : memref<30x16xf32, #tpu.memory_space<vmem>>, vector<2x16xf32>
    tpu.vector_store %arg9[%c6, %c0_78], %273 {strides = array<i32>} : memref<30x16xf32, #tpu.memory_space<vmem>>, vector<2x16xf32>,
    %cst_79 = arith.constant dense<0.000000e+00> : vector<2x64xf32>
    %275 = tpu.matmul %273, %2, %cst_79 {dimension_numbers = #tpu.dot_dimension_numbers<[1], [0], [0], [1], [0, 0, 1, 1], [], []>} : vector<2x16xf32>, vector<16x64xf32>, vector<2x64xf32> -> vector<2x64xf32>
    %276 = arith.addf %275, %3 : vector<2x64xf32>
    %277 = vector.extract_strided_slice %276 {offsets = [0, 0], sizes = [2, 48], strides = [1, 1]} : vector<2x64xf32> to vector<2x48xf32>
    %cst_80 = arith.constant 5.000000e-01 : f32
    %278 = vector.broadcast %cst_80 : f32 to vector<2x48xf32>
    %279 = arith.mulf %278, %277 : vector<2x48xf32>
    %280 = math.tanh %279 : vector<2x48xf32>
    %cst_81 = arith.constant 5.000000e-01 : f32
    %281 = vector.broadcast %cst_81 : f32 to vector<2x48xf32>
    %282 = arith.mulf %281, %280 : vector<2x48xf32>
    %cst_82 = arith.constant 5.000000e-01 : f32
    %283 = vector.broadcast %cst_82 : f32 to vector<2x48xf32>
    %284 = arith.addf %282, %283 : vector<2x48xf32>
    %285 = vector.extract_strided_slice %276 {offsets = [0, 48], sizes = [2, 16], strides = [1, 1]} : vector<2x64xf32> to vector<2x16xf32>
    %286 = math.tanh %285 : vector<2x16xf32>
    %287 = vector.extract_strided_slice %284 {offsets = [0, 0], sizes = [2, 16], strides = [1, 1]} : vector<2x48xf32> to vector<2x16xf32>
    %288 = vector.extract_strided_slice %284 {offsets = [0, 16], sizes = [2, 16], strides = [1, 1]} : vector<2x48xf32> to vector<2x16xf32>
    %289 = vector.extract_strided_slice %284 {offsets = [0, 32], sizes = [2, 16], strides = [1, 1]} : vector<2x48xf32> to vector<2x16xf32>
    %290 = arith.mulf %288, %271 : vector<2x16xf32>
    %291 = arith.mulf %287, %286 : vector<2x16xf32>
    %292 = arith.addf %290, %291 : vector<2x16xf32>
    %293 = math.tanh %292 : vector<2x16xf32>
    %294 = arith.mulf %289, %293 : vector<2x16xf32>
    %c8 = arith.constant 8 : index
    %c0_83 = arith.constant 0 : index
    %295 = vector.load %arg9[%c8, %c0_83] : memref<30x16xf32, #tpu.memory_space<vmem>>, vector<2x16xf32>
    tpu.vector_store %arg9[%c8, %c0_83], %294 {strides = array<i32>} : memref<30x16xf32, #tpu.memory_space<vmem>>, vector<2x16xf32>,
    %cst_84 = arith.constant dense<0.000000e+00> : vector<2x64xf32>
    %296 = tpu.matmul %294, %2, %cst_84 {dimension_numbers = #tpu.dot_dimension_numbers<[1], [0], [0], [1], [0, 0, 1, 1], [], []>} : vector<2x16xf32>, vector<16x64xf32>, vector<2x64xf32> -> vector<2x64xf32>
    %297 = arith.addf %296, %3 : vector<2x64xf32>
    %298 = vector.extract_strided_slice %297 {offsets = [0, 0], sizes = [2, 48], strides = [1, 1]} : vector<2x64xf32> to vector<2x48xf32>
    %cst_85 = arith.constant 5.000000e-01 : f32
    %299 = vector.broadcast %cst_85 : f32 to vector<2x48xf32>
    %300 = arith.mulf %299, %298 : vector<2x48xf32>
    %301 = math.tanh %300 : vector<2x48xf32>
    %cst_86 = arith.constant 5.000000e-01 : f32
    %302 = vector.broadcast %cst_86 : f32 to vector<2x48xf32>
    %303 = arith.mulf %302, %301 : vector<2x48xf32>
    %cst_87 = arith.constant 5.000000e-01 : f32
    %304 = vector.broadcast %cst_87 : f32 to vector<2x48xf32>
    %305 = arith.addf %303, %304 : vector<2x48xf32>
    %306 = vector.extract_strided_slice %297 {offsets = [0, 48], sizes = [2, 16], strides = [1, 1]} : vector<2x64xf32> to vector<2x16xf32>
    %307 = math.tanh %306 : vector<2x16xf32>
    %308 = vector.extract_strided_slice %305 {offsets = [0, 0], sizes = [2, 16], strides = [1, 1]} : vector<2x48xf32> to vector<2x16xf32>
    %309 = vector.extract_strided_slice %305 {offsets = [0, 16], sizes = [2, 16], strides = [1, 1]} : vector<2x48xf32> to vector<2x16xf32>
    %310 = vector.extract_strided_slice %305 {offsets = [0, 32], sizes = [2, 16], strides = [1, 1]} : vector<2x48xf32> to vector<2x16xf32>
    %311 = arith.mulf %309, %292 : vector<2x16xf32>
    %312 = arith.mulf %308, %307 : vector<2x16xf32>
    %313 = arith.addf %311, %312 : vector<2x16xf32>
    %314 = math.tanh %313 : vector<2x16xf32>
    %315 = arith.mulf %310, %314 : vector<2x16xf32>
    %c10 = arith.constant 10 : index
    %c0_88 = arith.constant 0 : index
    %316 = vector.load %arg9[%c10, %c0_88] : memref<30x16xf32, #tpu.memory_space<vmem>>, vector<2x16xf32>
    tpu.vector_store %arg9[%c10, %c0_88], %315 {strides = array<i32>} : memref<30x16xf32, #tpu.memory_space<vmem>>, vector<2x16xf32>,
    %cst_89 = arith.constant dense<0.000000e+00> : vector<2x64xf32>
    %317 = tpu.matmul %315, %2, %cst_89 {dimension_numbers = #tpu.dot_dimension_numbers<[1], [0], [0], [1], [0, 0, 1, 1], [], []>} : vector<2x16xf32>, vector<16x64xf32>, vector<2x64xf32> -> vector<2x64xf32>
    %318 = arith.addf %317, %3 : vector<2x64xf32>
    %319 = vector.extract_strided_slice %318 {offsets = [0, 0], sizes = [2, 48], strides = [1, 1]} : vector<2x64xf32> to vector<2x48xf32>
    %cst_90 = arith.constant 5.000000e-01 : f32
    %320 = vector.broadcast %cst_90 : f32 to vector<2x48xf32>
    %321 = arith.mulf %320, %319 : vector<2x48xf32>
    %322 = math.tanh %321 : vector<2x48xf32>
    %cst_91 = arith.constant 5.000000e-01 : f32
    %323 = vector.broadcast %cst_91 : f32 to vector<2x48xf32>
    %324 = arith.mulf %323, %322 : vector<2x48xf32>
    %cst_92 = arith.constant 5.000000e-01 : f32
    %325 = vector.broadcast %cst_92 : f32 to vector<2x48xf32>
    %326 = arith.addf %324, %325 : vector<2x48xf32>
    %327 = vector.extract_strided_slice %318 {offsets = [0, 48], sizes = [2, 16], strides = [1, 1]} : vector<2x64xf32> to vector<2x16xf32>
    %328 = math.tanh %327 : vector<2x16xf32>
    %329 = vector.extract_strided_slice %326 {offsets = [0, 0], sizes = [2, 16], strides = [1, 1]} : vector<2x48xf32> to vector<2x16xf32>
    %330 = vector.extract_strided_slice %326 {offsets = [0, 16], sizes = [2, 16], strides = [1, 1]} : vector<2x48xf32> to vector<2x16xf32>
    %331 = vector.extract_strided_slice %326 {offsets = [0, 32], sizes = [2, 16], strides = [1, 1]} : vector<2x48xf32> to vector<2x16xf32>
    %332 = arith.mulf %330, %313 : vector<2x16xf32>
    %333 = arith.mulf %329, %328 : vector<2x16xf32>
    %334 = arith.addf %332, %333 : vector<2x16xf32>
    %335 = math.tanh %334 : vector<2x16xf32>
    %336 = arith.mulf %331, %335 : vector<2x16xf32>
    %c12 = arith.constant 12 : index
    %c0_93 = arith.constant 0 : index
    %337 = vector.load %arg9[%c12, %c0_93] : memref<30x16xf32, #tpu.memory_space<vmem>>, vector<2x16xf32>
    tpu.vector_store %arg9[%c12, %c0_93], %336 {strides = array<i32>} : memref<30x16xf32, #tpu.memory_space<vmem>>, vector<2x16xf32>,
    %cst_94 = arith.constant dense<0.000000e+00> : vector<2x64xf32>
    %338 = tpu.matmul %336, %2, %cst_94 {dimension_numbers = #tpu.dot_dimension_numbers<[1], [0], [0], [1], [0, 0, 1, 1], [], []>} : vector<2x16xf32>, vector<16x64xf32>, vector<2x64xf32> -> vector<2x64xf32>
    %339 = arith.addf %338, %3 : vector<2x64xf32>
    %340 = vector.extract_strided_slice %339 {offsets = [0, 0], sizes = [2, 48], strides = [1, 1]} : vector<2x64xf32> to vector<2x48xf32>
    %cst_95 = arith.constant 5.000000e-01 : f32
    %341 = vector.broadcast %cst_95 : f32 to vector<2x48xf32>
    %342 = arith.mulf %341, %340 : vector<2x48xf32>
    %343 = math.tanh %342 : vector<2x48xf32>
    %cst_96 = arith.constant 5.000000e-01 : f32
    %344 = vector.broadcast %cst_96 : f32 to vector<2x48xf32>
    %345 = arith.mulf %344, %343 : vector<2x48xf32>
    %cst_97 = arith.constant 5.000000e-01 : f32
    %346 = vector.broadcast %cst_97 : f32 to vector<2x48xf32>
    %347 = arith.addf %345, %346 : vector<2x48xf32>
    %348 = vector.extract_strided_slice %339 {offsets = [0, 48], sizes = [2, 16], strides = [1, 1]} : vector<2x64xf32> to vector<2x16xf32>
    %349 = math.tanh %348 : vector<2x16xf32>
    %350 = vector.extract_strided_slice %347 {offsets = [0, 0], sizes = [2, 16], strides = [1, 1]} : vector<2x48xf32> to vector<2x16xf32>
    %351 = vector.extract_strided_slice %347 {offsets = [0, 16], sizes = [2, 16], strides = [1, 1]} : vector<2x48xf32> to vector<2x16xf32>
    %352 = vector.extract_strided_slice %347 {offsets = [0, 32], sizes = [2, 16], strides = [1, 1]} : vector<2x48xf32> to vector<2x16xf32>
    %353 = arith.mulf %351, %334 : vector<2x16xf32>
    %354 = arith.mulf %350, %349 : vector<2x16xf32>
    %355 = arith.addf %353, %354 : vector<2x16xf32>
    %356 = math.tanh %355 : vector<2x16xf32>
    %357 = arith.mulf %352, %356 : vector<2x16xf32>
    %c14 = arith.constant 14 : index
    %c0_98 = arith.constant 0 : index
    %358 = vector.load %arg9[%c14, %c0_98] : memref<30x16xf32, #tpu.memory_space<vmem>>, vector<2x16xf32>
    tpu.vector_store %arg9[%c14, %c0_98], %357 {strides = array<i32>} : memref<30x16xf32, #tpu.memory_space<vmem>>, vector<2x16xf32>,
    %cst_99 = arith.constant dense<0.000000e+00> : vector<2x64xf32>
    %359 = tpu.matmul %357, %2, %cst_99 {dimension_numbers = #tpu.dot_dimension_numbers<[1], [0], [0], [1], [0, 0, 1, 1], [], []>} : vector<2x16xf32>, vector<16x64xf32>, vector<2x64xf32> -> vector<2x64xf32>
    %360 = arith.addf %359, %3 : vector<2x64xf32>
    %361 = vector.extract_strided_slice %360 {offsets = [0, 0], sizes = [2, 48], strides = [1, 1]} : vector<2x64xf32> to vector<2x48xf32>
    %cst_100 = arith.constant 5.000000e-01 : f32
    %362 = vector.broadcast %cst_100 : f32 to vector<2x48xf32>
    %363 = arith.mulf %362, %361 : vector<2x48xf32>
    %364 = math.tanh %363 : vector<2x48xf32>
    %cst_101 = arith.constant 5.000000e-01 : f32
    %365 = vector.broadcast %cst_101 : f32 to vector<2x48xf32>
    %366 = arith.mulf %365, %364 : vector<2x48xf32>
    %cst_102 = arith.constant 5.000000e-01 : f32
    %367 = vector.broadcast %cst_102 : f32 to vector<2x48xf32>
    %368 = arith.addf %366, %367 : vector<2x48xf32>
    %369 = vector.extract_strided_slice %360 {offsets = [0, 48], sizes = [2, 16], strides = [1, 1]} : vector<2x64xf32> to vector<2x16xf32>
    %370 = math.tanh %369 : vector<2x16xf32>
    %371 = vector.extract_strided_slice %368 {offsets = [0, 0], sizes = [2, 16], strides = [1, 1]} : vector<2x48xf32> to vector<2x16xf32>
    %372 = vector.extract_strided_slice %368 {offsets = [0, 16], sizes = [2, 16], strides = [1, 1]} : vector<2x48xf32> to vector<2x16xf32>
    %373 = vector.extract_strided_slice %368 {offsets = [0, 32], sizes = [2, 16], strides = [1, 1]} : vector<2x48xf32> to vector<2x16xf32>
    %374 = arith.mulf %372, %355 : vector<2x16xf32>
    %375 = arith.mulf %371, %370 : vector<2x16xf32>
    %376 = arith.addf %374, %375 : vector<2x16xf32>
    %377 = math.tanh %376 : vector<2x16xf32>
    %378 = arith.mulf %373, %377 : vector<2x16xf32>
    %c16 = arith.constant 16 : index
    %c0_103 = arith.constant 0 : index
    %379 = vector.load %arg9[%c16, %c0_103] : memref<30x16xf32, #tpu.memory_space<vmem>>, vector<2x16xf32>
    tpu.vector_store %arg9[%c16, %c0_103], %378 {strides = array<i32>} : memref<30x16xf32, #tpu.memory_space<vmem>>, vector<2x16xf32>,
    %cst_104 = arith.constant dense<0.000000e+00> : vector<2x64xf32>
    %380 = tpu.matmul %378, %2, %cst_104 {dimension_numbers = #tpu.dot_dimension_numbers<[1], [0], [0], [1], [0, 0, 1, 1], [], []>} : vector<2x16xf32>, vector<16x64xf32>, vector<2x64xf32> -> vector<2x64xf32>
    %381 = arith.addf %380, %3 : vector<2x64xf32>
    %382 = vector.extract_strided_slice %381 {offsets = [0, 0], sizes = [2, 48], strides = [1, 1]} : vector<2x64xf32> to vector<2x48xf32>
    %cst_105 = arith.constant 5.000000e-01 : f32
    %383 = vector.broadcast %cst_105 : f32 to vector<2x48xf32>
    %384 = arith.mulf %383, %382 : vector<2x48xf32>
    %385 = math.tanh %384 : vector<2x48xf32>
    %cst_106 = arith.constant 5.000000e-01 : f32
    %386 = vector.broadcast %cst_106 : f32 to vector<2x48xf32>
    %387 = arith.mulf %386, %385 : vector<2x48xf32>
    %cst_107 = arith.constant 5.000000e-01 : f32
    %388 = vector.broadcast %cst_107 : f32 to vector<2x48xf32>
    %389 = arith.addf %387, %388 : vector<2x48xf32>
    %390 = vector.extract_strided_slice %381 {offsets = [0, 48], sizes = [2, 16], strides = [1, 1]} : vector<2x64xf32> to vector<2x16xf32>
    %391 = math.tanh %390 : vector<2x16xf32>
    %392 = vector.extract_strided_slice %389 {offsets = [0, 0], sizes = [2, 16], strides = [1, 1]} : vector<2x48xf32> to vector<2x16xf32>
    %393 = vector.extract_strided_slice %389 {offsets = [0, 16], sizes = [2, 16], strides = [1, 1]} : vector<2x48xf32> to vector<2x16xf32>
    %394 = vector.extract_strided_slice %389 {offsets = [0, 32], sizes = [2, 16], strides = [1, 1]} : vector<2x48xf32> to vector<2x16xf32>
    %395 = arith.mulf %393, %376 : vector<2x16xf32>
    %396 = arith.mulf %392, %391 : vector<2x16xf32>
    %397 = arith.addf %395, %396 : vector<2x16xf32>
    %398 = math.tanh %397 : vector<2x16xf32>
    %399 = arith.mulf %394, %398 : vector<2x16xf32>
    %c18 = arith.constant 18 : index
    %c0_108 = arith.constant 0 : index
    %400 = vector.load %arg9[%c18, %c0_108] : memref<30x16xf32, #tpu.memory_space<vmem>>, vector<2x16xf32>
    tpu.vector_store %arg9[%c18, %c0_108], %399 {strides = array<i32>} : memref<30x16xf32, #tpu.memory_space<vmem>>, vector<2x16xf32>,
    %cst_109 = arith.constant dense<0.000000e+00> : vector<2x64xf32>
    %401 = tpu.matmul %399, %2, %cst_109 {dimension_numbers = #tpu.dot_dimension_numbers<[1], [0], [0], [1], [0, 0, 1, 1], [], []>} : vector<2x16xf32>, vector<16x64xf32>, vector<2x64xf32> -> vector<2x64xf32>
    %402 = arith.addf %401, %3 : vector<2x64xf32>
    %403 = vector.extract_strided_slice %402 {offsets = [0, 0], sizes = [2, 48], strides = [1, 1]} : vector<2x64xf32> to vector<2x48xf32>
    %cst_110 = arith.constant 5.000000e-01 : f32
    %404 = vector.broadcast %cst_110 : f32 to vector<2x48xf32>
    %405 = arith.mulf %404, %403 : vector<2x48xf32>
    %406 = math.tanh %405 : vector<2x48xf32>
    %cst_111 = arith.constant 5.000000e-01 : f32
    %407 = vector.broadcast %cst_111 : f32 to vector<2x48xf32>
    %408 = arith.mulf %407, %406 : vector<2x48xf32>
    %cst_112 = arith.constant 5.000000e-01 : f32
    %409 = vector.broadcast %cst_112 : f32 to vector<2x48xf32>
    %410 = arith.addf %408, %409 : vector<2x48xf32>
    %411 = vector.extract_strided_slice %402 {offsets = [0, 48], sizes = [2, 16], strides = [1, 1]} : vector<2x64xf32> to vector<2x16xf32>
    %412 = math.tanh %411 : vector<2x16xf32>
    %413 = vector.extract_strided_slice %410 {offsets = [0, 0], sizes = [2, 16], strides = [1, 1]} : vector<2x48xf32> to vector<2x16xf32>
    %414 = vector.extract_strided_slice %410 {offsets = [0, 16], sizes = [2, 16], strides = [1, 1]} : vector<2x48xf32> to vector<2x16xf32>
    %415 = vector.extract_strided_slice %410 {offsets = [0, 32], sizes = [2, 16], strides = [1, 1]} : vector<2x48xf32> to vector<2x16xf32>
    %416 = arith.mulf %414, %397 : vector<2x16xf32>
    %417 = arith.mulf %413, %412 : vector<2x16xf32>
    %418 = arith.addf %416, %417 : vector<2x16xf32>
    %419 = math.tanh %418 : vector<2x16xf32>
    %420 = arith.mulf %415, %419 : vector<2x16xf32>
    %c20 = arith.constant 20 : index
    %c0_113 = arith.constant 0 : index
    %421 = vector.load %arg9[%c20, %c0_113] : memref<30x16xf32, #tpu.memory_space<vmem>>, vector<2x16xf32>
    tpu.vector_store %arg9[%c20, %c0_113], %420 {strides = array<i32>} : memref<30x16xf32, #tpu.memory_space<vmem>>, vector<2x16xf32>,
    %cst_114 = arith.constant dense<0.000000e+00> : vector<2x64xf32>
    %422 = tpu.matmul %420, %2, %cst_114 {dimension_numbers = #tpu.dot_dimension_numbers<[1], [0], [0], [1], [0, 0, 1, 1], [], []>} : vector<2x16xf32>, vector<16x64xf32>, vector<2x64xf32> -> vector<2x64xf32>
    %423 = arith.addf %422, %3 : vector<2x64xf32>
    %424 = vector.extract_strided_slice %423 {offsets = [0, 0], sizes = [2, 48], strides = [1, 1]} : vector<2x64xf32> to vector<2x48xf32>
    %cst_115 = arith.constant 5.000000e-01 : f32
    %425 = vector.broadcast %cst_115 : f32 to vector<2x48xf32>
    %426 = arith.mulf %425, %424 : vector<2x48xf32>
    %427 = math.tanh %426 : vector<2x48xf32>
    %cst_116 = arith.constant 5.000000e-01 : f32
    %428 = vector.broadcast %cst_116 : f32 to vector<2x48xf32>
    %429 = arith.mulf %428, %427 : vector<2x48xf32>
    %cst_117 = arith.constant 5.000000e-01 : f32
    %430 = vector.broadcast %cst_117 : f32 to vector<2x48xf32>
    %431 = arith.addf %429, %430 : vector<2x48xf32>
    %432 = vector.extract_strided_slice %423 {offsets = [0, 48], sizes = [2, 16], strides = [1, 1]} : vector<2x64xf32> to vector<2x16xf32>
    %433 = math.tanh %432 : vector<2x16xf32>
    %434 = vector.extract_strided_slice %431 {offsets = [0, 0], sizes = [2, 16], strides = [1, 1]} : vector<2x48xf32> to vector<2x16xf32>
    %435 = vector.extract_strided_slice %431 {offsets = [0, 16], sizes = [2, 16], strides = [1, 1]} : vector<2x48xf32> to vector<2x16xf32>
    %436 = vector.extract_strided_slice %431 {offsets = [0, 32], sizes = [2, 16], strides = [1, 1]} : vector<2x48xf32> to vector<2x16xf32>
    %437 = arith.mulf %435, %418 : vector<2x16xf32>
    %438 = arith.mulf %434, %433 : vector<2x16xf32>
    %439 = arith.addf %437, %438 : vector<2x16xf32>
    %440 = math.tanh %439 : vector<2x16xf32>
    %441 = arith.mulf %436, %440 : vector<2x16xf32>
    %c22 = arith.constant 22 : index
    %c0_118 = arith.constant 0 : index
    %442 = vector.load %arg9[%c22, %c0_118] : memref<30x16xf32, #tpu.memory_space<vmem>>, vector<2x16xf32>
    tpu.vector_store %arg9[%c22, %c0_118], %441 {strides = array<i32>} : memref<30x16xf32, #tpu.memory_space<vmem>>, vector<2x16xf32>,
    %cst_119 = arith.constant dense<0.000000e+00> : vector<2x64xf32>
    %443 = tpu.matmul %441, %2, %cst_119 {dimension_numbers = #tpu.dot_dimension_numbers<[1], [0], [0], [1], [0, 0, 1, 1], [], []>} : vector<2x16xf32>, vector<16x64xf32>, vector<2x64xf32> -> vector<2x64xf32>
    %444 = arith.addf %443, %3 : vector<2x64xf32>
    %445 = vector.extract_strided_slice %444 {offsets = [0, 0], sizes = [2, 48], strides = [1, 1]} : vector<2x64xf32> to vector<2x48xf32>
    %cst_120 = arith.constant 5.000000e-01 : f32
    %446 = vector.broadcast %cst_120 : f32 to vector<2x48xf32>
    %447 = arith.mulf %446, %445 : vector<2x48xf32>
    %448 = math.tanh %447 : vector<2x48xf32>
    %cst_121 = arith.constant 5.000000e-01 : f32
    %449 = vector.broadcast %cst_121 : f32 to vector<2x48xf32>
    %450 = arith.mulf %449, %448 : vector<2x48xf32>
    %cst_122 = arith.constant 5.000000e-01 : f32
    %451 = vector.broadcast %cst_122 : f32 to vector<2x48xf32>
    %452 = arith.addf %450, %451 : vector<2x48xf32>
    %453 = vector.extract_strided_slice %444 {offsets = [0, 48], sizes = [2, 16], strides = [1, 1]} : vector<2x64xf32> to vector<2x16xf32>
    %454 = math.tanh %453 : vector<2x16xf32>
    %455 = vector.extract_strided_slice %452 {offsets = [0, 0], sizes = [2, 16], strides = [1, 1]} : vector<2x48xf32> to vector<2x16xf32>
    %456 = vector.extract_strided_slice %452 {offsets = [0, 16], sizes = [2, 16], strides = [1, 1]} : vector<2x48xf32> to vector<2x16xf32>
    %457 = vector.extract_strided_slice %452 {offsets = [0, 32], sizes = [2, 16], strides = [1, 1]} : vector<2x48xf32> to vector<2x16xf32>
    %458 = arith.mulf %456, %439 : vector<2x16xf32>
    %459 = arith.mulf %455, %454 : vector<2x16xf32>
    %460 = arith.addf %458, %459 : vector<2x16xf32>
    %461 = math.tanh %460 : vector<2x16xf32>
    %462 = arith.mulf %457, %461 : vector<2x16xf32>
    %c24 = arith.constant 24 : index
    %c0_123 = arith.constant 0 : index
    %463 = vector.load %arg9[%c24, %c0_123] : memref<30x16xf32, #tpu.memory_space<vmem>>, vector<2x16xf32>
    tpu.vector_store %arg9[%c24, %c0_123], %462 {strides = array<i32>} : memref<30x16xf32, #tpu.memory_space<vmem>>, vector<2x16xf32>,
    %cst_124 = arith.constant dense<0.000000e+00> : vector<2x64xf32>
    %464 = tpu.matmul %462, %2, %cst_124 {dimension_numbers = #tpu.dot_dimension_numbers<[1], [0], [0], [1], [0, 0, 1, 1], [], []>} : vector<2x16xf32>, vector<16x64xf32>, vector<2x64xf32> -> vector<2x64xf32>
    %465 = arith.addf %464, %3 : vector<2x64xf32>
    %466 = vector.extract_strided_slice %465 {offsets = [0, 0], sizes = [2, 48], strides = [1, 1]} : vector<2x64xf32> to vector<2x48xf32>
    %cst_125 = arith.constant 5.000000e-01 : f32
    %467 = vector.broadcast %cst_125 : f32 to vector<2x48xf32>
    %468 = arith.mulf %467, %466 : vector<2x48xf32>
    %469 = math.tanh %468 : vector<2x48xf32>
    %cst_126 = arith.constant 5.000000e-01 : f32
    %470 = vector.broadcast %cst_126 : f32 to vector<2x48xf32>
    %471 = arith.mulf %470, %469 : vector<2x48xf32>
    %cst_127 = arith.constant 5.000000e-01 : f32
    %472 = vector.broadcast %cst_127 : f32 to vector<2x48xf32>
    %473 = arith.addf %471, %472 : vector<2x48xf32>
    %474 = vector.extract_strided_slice %465 {offsets = [0, 48], sizes = [2, 16], strides = [1, 1]} : vector<2x64xf32> to vector<2x16xf32>
    %475 = math.tanh %474 : vector<2x16xf32>
    %476 = vector.extract_strided_slice %473 {offsets = [0, 0], sizes = [2, 16], strides = [1, 1]} : vector<2x48xf32> to vector<2x16xf32>
    %477 = vector.extract_strided_slice %473 {offsets = [0, 16], sizes = [2, 16], strides = [1, 1]} : vector<2x48xf32> to vector<2x16xf32>
    %478 = vector.extract_strided_slice %473 {offsets = [0, 32], sizes = [2, 16], strides = [1, 1]} : vector<2x48xf32> to vector<2x16xf32>
    %479 = arith.mulf %477, %460 : vector<2x16xf32>
    %480 = arith.mulf %476, %475 : vector<2x16xf32>
    %481 = arith.addf %479, %480 : vector<2x16xf32>
    %482 = math.tanh %481 : vector<2x16xf32>
    %483 = arith.mulf %478, %482 : vector<2x16xf32>
    %c26 = arith.constant 26 : index
    %c0_128 = arith.constant 0 : index
    %484 = vector.load %arg9[%c26, %c0_128] : memref<30x16xf32, #tpu.memory_space<vmem>>, vector<2x16xf32>
    tpu.vector_store %arg9[%c26, %c0_128], %483 {strides = array<i32>} : memref<30x16xf32, #tpu.memory_space<vmem>>, vector<2x16xf32>,
    %cst_129 = arith.constant dense<0.000000e+00> : vector<2x64xf32>
    %485 = tpu.matmul %483, %2, %cst_129 {dimension_numbers = #tpu.dot_dimension_numbers<[1], [0], [0], [1], [0, 0, 1, 1], [], []>} : vector<2x16xf32>, vector<16x64xf32>, vector<2x64xf32> -> vector<2x64xf32>
    %486 = arith.addf %485, %3 : vector<2x64xf32>
    %487 = vector.extract_strided_slice %486 {offsets = [0, 0], sizes = [2, 48], strides = [1, 1]} : vector<2x64xf32> to vector<2x48xf32>
    %cst_130 = arith.constant 5.000000e-01 : f32
    %488 = vector.broadcast %cst_130 : f32 to vector<2x48xf32>
    %489 = arith.mulf %488, %487 : vector<2x48xf32>
    %490 = math.tanh %489 : vector<2x48xf32>
    %cst_131 = arith.constant 5.000000e-01 : f32
    %491 = vector.broadcast %cst_131 : f32 to vector<2x48xf32>
    %492 = arith.mulf %491, %490 : vector<2x48xf32>
    %cst_132 = arith.constant 5.000000e-01 : f32
    %493 = vector.broadcast %cst_132 : f32 to vector<2x48xf32>
    %494 = arith.addf %492, %493 : vector<2x48xf32>
    %495 = vector.extract_strided_slice %486 {offsets = [0, 48], sizes = [2, 16], strides = [1, 1]} : vector<2x64xf32> to vector<2x16xf32>
    %496 = math.tanh %495 : vector<2x16xf32>
    %497 = vector.extract_strided_slice %494 {offsets = [0, 0], sizes = [2, 16], strides = [1, 1]} : vector<2x48xf32> to vector<2x16xf32>
    %498 = vector.extract_strided_slice %494 {offsets = [0, 16], sizes = [2, 16], strides = [1, 1]} : vector<2x48xf32> to vector<2x16xf32>
    %499 = vector.extract_strided_slice %494 {offsets = [0, 32], sizes = [2, 16], strides = [1, 1]} : vector<2x48xf32> to vector<2x16xf32>
    %500 = arith.mulf %498, %481 : vector<2x16xf32>
    %501 = arith.mulf %497, %496 : vector<2x16xf32>
    %502 = arith.addf %500, %501 : vector<2x16xf32>
    %503 = math.tanh %502 : vector<2x16xf32>
    %504 = arith.mulf %499, %503 : vector<2x16xf32>
    %c28 = arith.constant 28 : index
    %c0_133 = arith.constant 0 : index
    %505 = vector.load %arg9[%c28, %c0_133] : memref<30x16xf32, #tpu.memory_space<vmem>>, vector<2x16xf32>
    tpu.vector_store %arg9[%c28, %c0_133], %504 {strides = array<i32>} : memref<30x16xf32, #tpu.memory_space<vmem>>, vector<2x16xf32>,
    %c0_134 = arith.constant 0 : index
    %c0_135 = arith.constant 0 : index
    %506 = vector.load %arg9[%c0_134, %c0_135] : memref<30x16xf32, #tpu.memory_space<vmem>>, vector<30x16xf32>
    %c0_136 = arith.constant 0 : index
    %c0_137 = arith.constant 0 : index
    %507 = vector.load %arg6[%c0_136, %c0_137] : memref<16x34xf32, #tpu.memory_space<vmem>>, vector<16x34xf32>
    %cst_138 = arith.constant dense<0.000000e+00> : vector<30x34xf32>
    %508 = tpu.matmul %506, %507, %cst_138 {dimension_numbers = #tpu.dot_dimension_numbers<[1], [0], [0], [1], [0, 0, 1, 1], [], []>} : vector<30x16xf32>, vector<16x34xf32>, vector<30x34xf32> -> vector<30x34xf32>
    %c0_139 = arith.constant 0 : index
    %c0_140 = arith.constant 0 : index
    %509 = vector.load %arg7[%c0_139, %c0_140] : memref<30x34xf32, #tpu.memory_space<vmem>>, vector<30x34xf32>
    %510 = arith.addf %508, %509 : vector<30x34xf32>
    %c0_141 = arith.constant 0 : index
    %c0_142 = arith.constant 0 : index
    %511 = vector.load %arg8[%c0_141, %c0_142] : memref<30x34xf32, #tpu.memory_space<vmem>>, vector<30x34xf32>
    tpu.vector_store %arg8[%c0_141, %c0_142], %510 {strides = array<i32>} : memref<30x34xf32, #tpu.memory_space<vmem>>, vector<30x34xf32>,
    return
  }
}

</mosaic_0001>

<llo_original>
// kernel: lstm_forward.1
$region0: #{lstm_forward.1}
  #allocation0 [shape = 'u32[]', space=smem, size = 0x4, offset = 0x4, fixed_abs, tag = 'smem constant byte address 0x4 - core index']
  #allocation1 [shape = 'u32[72,128]{1,0:T(1,128)}', space=vmem, size = 0x9000, scoped, tag = 'internal scratch']
  #allocation2 [shape = 'f32[30,16]{1,0:T(8,128)}', space=vmem, size = 0x4000, scoped, tag = 'scratch operand']
  %s0 = inlined_call_operand.vmem [shape: f32[8,2,64], index: 0, kind: input, shape index: {}]
  %s1 = inlined_call_operand.vmem [shape: f32[16,64], index: 1, kind: input, shape index: {}]
  %s2 = inlined_call_operand.vmem [shape: f32[16,64], index: 2, kind: input, shape index: {}]
  %s3 = inlined_call_operand.vmem [shape: f32[2,64], index: 3, kind: input, shape index: {}]
  %s4 = inlined_call_operand.vmem [shape: f32[16,64], index: 4, kind: input, shape index: {}]
  %s5 = inlined_call_operand.vmem [shape: f32[2,64], index: 5, kind: input, shape index: {}]
  %s6 = inlined_call_operand.vmem [shape: f32[16,34], index: 6, kind: input, shape index: {}]
  %s7 = inlined_call_operand.vmem [shape: f32[30,34], index: 7, kind: input, shape index: {}]
  %s8 = inlined_call_operand.vmem [shape: f32[30,34], index: 8, kind: output, shape index: {}]
  %s9 = sld [smem:[#allocation0]]
  $region42: #{lstm_forward.1} parent=0
    _
  %s11 = ssub.s32 1, %s9
  %s12 = scalar_select 0, %s11, %s9
  // Predicated region
  $region2: #{lstm_forward.1} parent=0 // pred_check
    _
  $region3: #{lstm_forward.1} parent=0 // pred_check_branch
    %14 = sbr.rel (0) target = $region5
  $region4: #{lstm_forward.1} parent=0 // pred_region
    _
  $region5: #{lstm_forward.1} parent=0 // pred_fallthru
    _
  // Predicated region
  $region6: #{lstm_forward.1} parent=0 // pred_check
    _
  $region7: #{lstm_forward.1} parent=0 // pred_check_branch
    %16 = sbr.rel (0) target = $region9
  $region8: #{lstm_forward.1} parent=0 // pred_region
    _
  $region9: #{lstm_forward.1} parent=0 // pred_fallthru
    _
  // Predicated region
  $region10: #{lstm_forward.1} parent=0 // pred_check
    _
  $region11: #{lstm_forward.1} parent=0 // pred_check_branch
    %18 = sbr.rel (0) target = $region13
  $region12: #{lstm_forward.1} parent=0 // pred_region
    _
  $region13: #{lstm_forward.1} parent=0 // pred_fallthru
    _
  // Predicated region
  $region14: #{lstm_forward.1} parent=0 // pred_check
    _
  $region15: #{lstm_forward.1} parent=0 // pred_check_branch
    %20 = sbr.rel (0) target = $region17
  $region16: #{lstm_forward.1} parent=0 // pred_region
    _
  $region17: #{lstm_forward.1} parent=0 // pred_fallthru
    _
  // Predicated region
  $region18: #{lstm_forward.1} parent=0 // pred_check
    _
  $region19: #{lstm_forward.1} parent=0 // pred_check_branch
    %22 = sbr.rel (0) target = $region21
  $region20: #{lstm_forward.1} parent=0 // pred_region
    _
  $region21: #{lstm_forward.1} parent=0 // pred_fallthru
    _
  // Predicated region
  $region22: #{lstm_forward.1} parent=0 // pred_check
    _
  $region23: #{lstm_forward.1} parent=0 // pred_check_branch
    %24 = sbr.rel (0) target = $region25
  $region24: #{lstm_forward.1} parent=0 // pred_region
    _
  $region25: #{lstm_forward.1} parent=0 // pred_fallthru
    _
  // Predicated region
  $region26: #{lstm_forward.1} parent=0 // pred_check
    _
  $region27: #{lstm_forward.1} parent=0 // pred_check_branch
    %26 = sbr.rel (0) target = $region29
  $region28: #{lstm_forward.1} parent=0 // pred_region
    _
  $region29: #{lstm_forward.1} parent=0 // pred_fallthru
    _
  // Predicated region
  $region30: #{lstm_forward.1} parent=0 // pred_check
    _
  $region31: #{lstm_forward.1} parent=0 // pred_check_branch
    %28 = sbr.rel (0) target = $region33
  $region32: #{lstm_forward.1} parent=0 // pred_region
    _
  $region33: #{lstm_forward.1} parent=0 // pred_fallthru
    _
  %v29 = vld [vmem:[%s1] sm:$0xff]
  %v30 = vld [vmem:[%s1 + $0x8] sm:$0xff]
  %v31 = vld [vmem:[%s2] sm:$0xff]
  %v32 = vld [vmem:[%s2 + $0x8] sm:$0xff]
  %v33 = vld [vmem:[%s4] sm:$0xff]
  %v34 = vld [vmem:[%s4 + $0x8] sm:$0xff]
  %v35 = vld [vmem:[%s5] sm:$0x3]
  %v36 = vld [vmem:[%s0] sm:$0x3]
  %vm37 = vcmask 130048
  %v39 = vsel %vm37, 0.0, 0
  %41 = vmatpush.msra.mxu0 0.0
  %42 = vmatpush.msra.mxu0 0.0
  %43 = vmatpush.msra.mxu0 0.0
  %44 = vmatpush.msra.mxu0 0.0
  %45 = vmatpush.msra.mxu0 0.0
  %46 = vmatpush.msra.mxu0 0.0
  %47 = vmatpush.msra.mxu0 0.0
  %48 = vmatpush.msra.mxu0 0.0
  %49 = vmatpush.msra.mxu0 0.0
  %50 = vmatpush.msra.mxu0 0.0
  %51 = vmatpush.msra.mxu0 0.0
  %52 = vmatpush.msra.mxu0 0.0
  %53 = vmatpush.msra.mxu0 0.0
  %54 = vmatpush.msra.mxu0 0.0
  %55 = vmatpush.msra.mxu0 %v30
  %56 = vmatpush.msra.mxu0 %v29
  %57 = vmatmul.f32.gmra.mxu0 %v39
  %v58 = vpop.f32.mrf.mxu0
  %v59 = vadd.f32 0.0, %v58
  %60 = vdwg.mxu0
  %v61 = vadd.f32 %v36, %v59
  %v62 = vmul.f32 %v61, 0.5
  %v63 = vtanh.pop %v62
  %v64 = vmul.f32 %v63, 0.5
  %v65 = vadd.f32 %v64, 0.5
  %v66 = vtanh.pop %v61
  %v67 = vmul.f32 %v65, 0.0
  %69 = vrot.lane.b32.xlu0 %v66, 80
  %v70 = vpop.permute.xlu0 %69
  %v72 = vmul.f32 %v65, %v70
  %74 = vrot.lane.b32.xlu0 %v72, 16
  %v75 = vpop.permute.xlu0 %74
  %v77 = vadd.f32 %v67, %v75
  %v78 = vtanh.pop %v77
  %80 = vrot.lane.b32.xlu0 %v78, 16
  %v81 = vpop.permute.xlu0 %80
  %v83 = vmul.f32 %v65, %v81
  %s84 = scalar_lea.vmem %s0, 2
  %v85 = vld [vmem:[%s84] sm:$0x3]
  %87 = vrot.lane.b32.xlu0 %v83, 96
  %v88 = vpop.permute.xlu0 %87
  %v89 = vsel %vm37, %v88, 0
  %91 = vmatpush.msra.mxu0 0.0
  %92 = vmatpush.msra.mxu0 0.0
  %93 = vmatpush.msra.mxu0 0.0
  %94 = vmatpush.msra.mxu0 0.0
  %95 = vmatpush.msra.mxu0 0.0
  %96 = vmatpush.msra.mxu0 0.0
  %97 = vmatpush.msra.mxu0 0.0
  %98 = vmatpush.msra.mxu0 0.0
  %99 = vmatpush.msra.mxu0 0.0
  %100 = vmatpush.msra.mxu0 0.0
  %101 = vmatpush.msra.mxu0 0.0
  %102 = vmatpush.msra.mxu0 0.0
  %103 = vmatpush.msra.mxu0 0.0
  %104 = vmatpush.msra.mxu0 0.0
  %105 = vmatpush.msra.mxu0 %v30
  %106 = vmatpush.msra.mxu0 %v29
  %107 = vmatmul.f32.gmra.mxu0 %v89
  %v108 = vpop.f32.mrf.mxu0
  %v109 = vadd.f32 0.0, %v108
  %110 = vdwg.mxu0
  %v111 = vadd.f32 %v85, %v109
  %v112 = vmul.f32 %v111, 0.5
  %v113 = vtanh.pop %v112
  %v114 = vmul.f32 %v113, 0.5
  %v115 = vadd.f32 %v114, 0.5
  %v116 = vtanh.pop %v111
  %v117 = vmul.f32 %v115, %v77
  %119 = vrot.lane.b32.xlu0 %v116, 80
  %v120 = vpop.permute.xlu0 %119
  %v122 = vmul.f32 %v115, %v120
  %124 = vrot.lane.b32.xlu0 %v122, 16
  %v125 = vpop.permute.xlu0 %124
  %v127 = vadd.f32 %v117, %v125
  %v128 = vtanh.pop %v127
  %130 = vrot.lane.b32.xlu0 %v128, 16
  %v131 = vpop.permute.xlu0 %130
  %v133 = vmul.f32 %v115, %v131
  %s134 = scalar_lea.vmem %s0, 4
  %v135 = vld [vmem:[%s134] sm:$0x3]
  %137 = vrot.lane.b32.xlu0 %v133, 96
  %v138 = vpop.permute.xlu0 %137
  %v139 = vsel %vm37, %v138, 0
  %141 = vmatpush.msra.mxu0 0.0
  %142 = vmatpush.msra.mxu0 0.0
  %143 = vmatpush.msra.mxu0 0.0
  %144 = vmatpush.msra.mxu0 0.0
  %145 = vmatpush.msra.mxu0 0.0
  %146 = vmatpush.msra.mxu0 0.0
  %147 = vmatpush.msra.mxu0 0.0
  %148 = vmatpush.msra.mxu0 0.0
  %149 = vmatpush.msra.mxu0 0.0
  %150 = vmatpush.msra.mxu0 0.0
  %151 = vmatpush.msra.mxu0 0.0
  %152 = vmatpush.msra.mxu0 0.0
  %153 = vmatpush.msra.mxu0 0.0
  %154 = vmatpush.msra.mxu0 0.0
  %155 = vmatpush.msra.mxu0 %v30
  %156 = vmatpush.msra.mxu0 %v29
  %157 = vmatmul.f32.gmra.mxu0 %v139
  %v158 = vpop.f32.mrf.mxu0
  %v159 = vadd.f32 0.0, %v158
  %160 = vdwg.mxu0
  %v161 = vadd.f32 %v135, %v159
  %v162 = vmul.f32 %v161, 0.5
  %v163 = vtanh.pop %v162
  %v164 = vmul.f32 %v163, 0.5
  %v165 = vadd.f32 %v164, 0.5
  %v166 = vtanh.pop %v161
  %v167 = vmul.f32 %v165, %v127
  %169 = vrot.lane.b32.xlu0 %v166, 80
  %v170 = vpop.permute.xlu0 %169
  %v172 = vmul.f32 %v165, %v170
  %174 = vrot.lane.b32.xlu0 %v172, 16
  %v175 = vpop.permute.xlu0 %174
  %v177 = vadd.f32 %v167, %v175
  %v178 = vtanh.pop %v177
  %180 = vrot.lane.b32.xlu0 %v178, 16
  %v181 = vpop.permute.xlu0 %180
  %v183 = vmul.f32 %v165, %v181
  %s184 = scalar_lea.vmem %s0, 6
  %v185 = vld [vmem:[%s184] sm:$0x3]
  %187 = vrot.lane.b32.xlu0 %v183, 96
  %v188 = vpop.permute.xlu0 %187
  %v189 = vsel %vm37, %v188, 0
  %191 = vmatpush.msra.mxu0 0.0
  %192 = vmatpush.msra.mxu0 0.0
  %193 = vmatpush.msra.mxu0 0.0
  %194 = vmatpush.msra.mxu0 0.0
  %195 = vmatpush.msra.mxu0 0.0
  %196 = vmatpush.msra.mxu0 0.0
  %197 = vmatpush.msra.mxu0 0.0
  %198 = vmatpush.msra.mxu0 0.0
  %199 = vmatpush.msra.mxu0 0.0
  %200 = vmatpush.msra.mxu0 0.0
  %201 = vmatpush.msra.mxu0 0.0
  %202 = vmatpush.msra.mxu0 0.0
  %203 = vmatpush.msra.mxu0 0.0
  %204 = vmatpush.msra.mxu0 0.0
  %205 = vmatpush.msra.mxu0 %v30
  %206 = vmatpush.msra.mxu0 %v29
  %207 = vmatmul.f32.gmra.mxu0 %v189
  %v208 = vpop.f32.mrf.mxu0
  %v209 = vadd.f32 0.0, %v208
  %210 = vdwg.mxu0
  %v211 = vadd.f32 %v185, %v209
  %v212 = vmul.f32 %v211, 0.5
  %v213 = vtanh.pop %v212
  %v214 = vmul.f32 %v213, 0.5
  %v215 = vadd.f32 %v214, 0.5
  %v216 = vtanh.pop %v211
  %v217 = vmul.f32 %v215, %v177
  %219 = vrot.lane.b32.xlu0 %v216, 80
  %v220 = vpop.permute.xlu0 %219
  %v222 = vmul.f32 %v215, %v220
  %224 = vrot.lane.b32.xlu0 %v222, 16
  %v225 = vpop.permute.xlu0 %224
  %v227 = vadd.f32 %v217, %v225
  %v228 = vtanh.pop %v227
  %230 = vrot.lane.b32.xlu0 %v228, 16
  %v231 = vpop.permute.xlu0 %230
  %v233 = vmul.f32 %v215, %v231
  %s234 = scalar_lea.vmem %s0, 8
  %v235 = vld [vmem:[%s234] sm:$0x3]
  %237 = vrot.lane.b32.xlu0 %v233, 96
  %v238 = vpop.permute.xlu0 %237
  %v239 = vsel %vm37, %v238, 0
  %241 = vmatpush.msra.mxu0 0.0
  %242 = vmatpush.msra.mxu0 0.0
  %243 = vmatpush.msra.mxu0 0.0
  %244 = vmatpush.msra.mxu0 0.0
  %245 = vmatpush.msra.mxu0 0.0
  %246 = vmatpush.msra.mxu0 0.0
  %247 = vmatpush.msra.mxu0 0.0
  %248 = vmatpush.msra.mxu0 0.0
  %249 = vmatpush.msra.mxu0 0.0
  %250 = vmatpush.msra.mxu0 0.0
  %251 = vmatpush.msra.mxu0 0.0
  %252 = vmatpush.msra.mxu0 0.0
  %253 = vmatpush.msra.mxu0 0.0
  %254 = vmatpush.msra.mxu0 0.0
  %255 = vmatpush.msra.mxu0 %v30
  %256 = vmatpush.msra.mxu0 %v29
  %257 = vmatmul.f32.gmra.mxu0 %v239
  %v258 = vpop.f32.mrf.mxu0
  %v259 = vadd.f32 0.0, %v258
  %260 = vdwg.mxu0
  %v261 = vadd.f32 %v235, %v259
  %v262 = vmul.f32 %v261, 0.5
  %v263 = vtanh.pop %v262
  %v264 = vmul.f32 %v263, 0.5
  %v265 = vadd.f32 %v264, 0.5
  %v266 = vtanh.pop %v261
  %v267 = vmul.f32 %v265, %v227
  %269 = vrot.lane.b32.xlu0 %v266, 80
  %v270 = vpop.permute.xlu0 %269
  %v272 = vmul.f32 %v265, %v270
  %274 = vrot.lane.b32.xlu0 %v272, 16
  %v275 = vpop.permute.xlu0 %274
  %v277 = vadd.f32 %v267, %v275
  %v278 = vtanh.pop %v277
  %280 = vrot.lane.b32.xlu0 %v278, 16
  %v281 = vpop.permute.xlu0 %280
  %v283 = vmul.f32 %v265, %v281
  %s284 = scalar_lea.vmem %s0, 10
  %v285 = vld [vmem:[%s284] sm:$0x3]
  %287 = vrot.lane.b32.xlu0 %v283, 96
  %v288 = vpop.permute.xlu0 %287
  %v289 = vsel %vm37, %v288, 0
  %291 = vmatpush.msra.mxu0 0.0
  %292 = vmatpush.msra.mxu0 0.0
  %293 = vmatpush.msra.mxu0 0.0
  %294 = vmatpush.msra.mxu0 0.0
  %295 = vmatpush.msra.mxu0 0.0
  %296 = vmatpush.msra.mxu0 0.0
  %297 = vmatpush.msra.mxu0 0.0
  %298 = vmatpush.msra.mxu0 0.0
  %299 = vmatpush.msra.mxu0 0.0
  %300 = vmatpush.msra.mxu0 0.0
  %301 = vmatpush.msra.mxu0 0.0
  %302 = vmatpush.msra.mxu0 0.0
  %303 = vmatpush.msra.mxu0 0.0
  %304 = vmatpush.msra.mxu0 0.0
  %305 = vmatpush.msra.mxu0 %v30
  %306 = vmatpush.msra.mxu0 %v29
  %307 = vmatmul.f32.gmra.mxu0 %v289
  %v308 = vpop.f32.mrf.mxu0
  %v309 = vadd.f32 0.0, %v308
  %310 = vdwg.mxu0
  %v311 = vadd.f32 %v285, %v309
  %v312 = vmul.f32 %v311, 0.5
  %v313 = vtanh.pop %v312
  %v314 = vmul.f32 %v313, 0.5
  %v315 = vadd.f32 %v314, 0.5
  %v316 = vtanh.pop %v311
  %v317 = vmul.f32 %v315, %v277
  %319 = vrot.lane.b32.xlu0 %v316, 80
  %v320 = vpop.permute.xlu0 %319
  %v322 = vmul.f32 %v315, %v320
  %324 = vrot.lane.b32.xlu0 %v322, 16
  %v325 = vpop.permute.xlu0 %324
  %v327 = vadd.f32 %v317, %v325
  %v328 = vtanh.pop %v327
  %330 = vrot.lane.b32.xlu0 %v328, 16
  %v331 = vpop.permute.xlu0 %330
  %v333 = vmul.f32 %v315, %v331
  %s334 = scalar_lea.vmem %s0, 12
  %v335 = vld [vmem:[%s334] sm:$0x3]
  %337 = vrot.lane.b32.xlu0 %v333, 96
  %v338 = vpop.permute.xlu0 %337
  %v339 = vsel %vm37, %v338, 0
  %341 = vmatpush.msra.mxu0 0.0
  %342 = vmatpush.msra.mxu0 0.0
  %343 = vmatpush.msra.mxu0 0.0
  %344 = vmatpush.msra.mxu0 0.0
  %345 = vmatpush.msra.mxu0 0.0
  %346 = vmatpush.msra.mxu0 0.0
  %347 = vmatpush.msra.mxu0 0.0
  %348 = vmatpush.msra.mxu0 0.0
  %349 = vmatpush.msra.mxu0 0.0
  %350 = vmatpush.msra.mxu0 0.0
  %351 = vmatpush.msra.mxu0 0.0
  %352 = vmatpush.msra.mxu0 0.0
  %353 = vmatpush.msra.mxu0 0.0
  %354 = vmatpush.msra.mxu0 0.0
  %355 = vmatpush.msra.mxu0 %v30
  %356 = vmatpush.msra.mxu0 %v29
  %357 = vmatmul.f32.gmra.mxu0 %v339
  %v358 = vpop.f32.mrf.mxu0
  %v359 = vadd.f32 0.0, %v358
  %360 = vdwg.mxu0
  %v361 = vadd.f32 %v335, %v359
  %v362 = vmul.f32 %v361, 0.5
  %v363 = vtanh.pop %v362
  %v364 = vmul.f32 %v363, 0.5
  %v365 = vadd.f32 %v364, 0.5
  %v366 = vtanh.pop %v361
  %v367 = vmul.f32 %v365, %v327
  %369 = vrot.lane.b32.xlu0 %v366, 80
  %v370 = vpop.permute.xlu0 %369
  %v372 = vmul.f32 %v365, %v370
  %374 = vrot.lane.b32.xlu0 %v372, 16
  %v375 = vpop.permute.xlu0 %374
  %v377 = vadd.f32 %v367, %v375
  %v378 = vtanh.pop %v377
  %380 = vrot.lane.b32.xlu0 %v378, 16
  %v381 = vpop.permute.xlu0 %380
  %v383 = vmul.f32 %v365, %v381
  %s384 = scalar_lea.vmem %s0, 14
  %v385 = vld [vmem:[%s384] sm:$0x3]
  %387 = vrot.lane.b32.xlu0 %v383, 96
  %v388 = vpop.permute.xlu0 %387
  %v389 = vsel %vm37, %v388, 0
  %391 = vmatpush.msra.mxu0 0.0
  %392 = vmatpush.msra.mxu0 0.0
  %393 = vmatpush.msra.mxu0 0.0
  %394 = vmatpush.msra.mxu0 0.0
  %395 = vmatpush.msra.mxu0 0.0
  %396 = vmatpush.msra.mxu0 0.0
  %397 = vmatpush.msra.mxu0 0.0
  %398 = vmatpush.msra.mxu0 0.0
  %399 = vmatpush.msra.mxu0 0.0
  %400 = vmatpush.msra.mxu0 0.0
  %401 = vmatpush.msra.mxu0 0.0
  %402 = vmatpush.msra.mxu0 0.0
  %403 = vmatpush.msra.mxu0 0.0
  %404 = vmatpush.msra.mxu0 0.0
  %405 = vmatpush.msra.mxu0 %v30
  %406 = vmatpush.msra.mxu0 %v29
  %407 = vmatmul.f32.gmra.mxu0 %v389
  %v408 = vpop.f32.mrf.mxu0
  %v409 = vadd.f32 0.0, %v408
  %410 = vdwg.mxu0
  %v411 = vadd.f32 %v385, %v409
  %v412 = vmul.f32 %v411, 0.5
  %v413 = vtanh.pop %v412
  %v414 = vmul.f32 %v413, 0.5
  %v415 = vadd.f32 %v414, 0.5
  %v416 = vtanh.pop %v411
  %v417 = vmul.f32 %v415, %v377
  %419 = vrot.lane.b32.xlu0 %v416, 80
  %v420 = vpop.permute.xlu0 %419
  %v422 = vmul.f32 %v415, %v420
  %424 = vrot.lane.b32.xlu0 %v422, 16
  %v425 = vpop.permute.xlu0 %424
  %v427 = vadd.f32 %v417, %v425
  %v428 = vtanh.pop %v427
  %430 = vrot.lane.b32.xlu0 %v428, 16
  %v431 = vpop.permute.xlu0 %430
  %v433 = vmul.f32 %v415, %v431
  %v434 = vld [vmem:[%s3] sm:$0x3]
  %436 = vrot.lane.b32.xlu0 %v433, 96
  %v437 = vpop.permute.xlu0 %436
  %v438 = vsel %vm37, %v437, 0
  %440 = vmatpush.msra.mxu0 0.0
  %441 = vmatpush.msra.mxu0 0.0
  %442 = vmatpush.msra.mxu0 0.0
  %443 = vmatpush.msra.mxu0 0.0
  %444 = vmatpush.msra.mxu0 0.0
  %445 = vmatpush.msra.mxu0 0.0
  %446 = vmatpush.msra.mxu0 0.0
  %447 = vmatpush.msra.mxu0 0.0
  %448 = vmatpush.msra.mxu0 0.0
  %449 = vmatpush.msra.mxu0 0.0
  %450 = vmatpush.msra.mxu0 0.0
  %451 = vmatpush.msra.mxu0 0.0
  %452 = vmatpush.msra.mxu0 0.0
  %453 = vmatpush.msra.mxu0 0.0
  %454 = vmatpush.msra.mxu0 %v32
  %455 = vmatpush.msra.mxu0 %v31
  %456 = vmatmul.f32.gmra.mxu0 %v438
  %v457 = vpop.f32.mrf.mxu0
  %v458 = vadd.f32 0.0, %v457
  %459 = vdwg.mxu0
  %v460 = vadd.f32 %v434, %v458
  %v461 = vmul.f32 %v460, 0.5
  %v462 = vtanh.pop %v461
  %v463 = vmul.f32 %v462, 0.5
  %v464 = vadd.f32 %v463, 0.5
  %v465 = vtanh.pop %v460
  %v466 = vmul.f32 %v464, %v427
  %468 = vrot.lane.b32.xlu0 %v465, 80
  %v469 = vpop.permute.xlu0 %468
  %v471 = vmul.f32 %v464, %v469
  %473 = vrot.lane.b32.xlu0 %v471, 16
  %v474 = vpop.permute.xlu0 %473
  %v476 = vadd.f32 %v466, %v474
  %v477 = vtanh.pop %v476
  %479 = vrot.lane.b32.xlu0 %v477, 16
  %v480 = vpop.permute.xlu0 %479
  %v482 = vmul.f32 %v464, %v480
  %484 = vrot.lane.b32.xlu0 %v482, 96
  %v485 = vpop.permute.xlu0 %484
  %vm487 = vcmask 123904
  %488 = vst.msk [vmem:[#allocation2] sm:$0x3] %vm487, %v485
  %v489 = vsel %vm37, %v485, 0
  %491 = vmatpush.msra.mxu0 0.0
  %492 = vmatpush.msra.mxu0 0.0
  %493 = vmatpush.msra.mxu0 0.0
  %494 = vmatpush.msra.mxu0 0.0
  %495 = vmatpush.msra.mxu0 0.0
  %496 = vmatpush.msra.mxu0 0.0
  %497 = vmatpush.msra.mxu0 0.0
  %498 = vmatpush.msra.mxu0 0.0
  %499 = vmatpush.msra.mxu0 0.0
  %500 = vmatpush.msra.mxu0 0.0
  %501 = vmatpush.msra.mxu0 0.0
  %502 = vmatpush.msra.mxu0 0.0
  %503 = vmatpush.msra.mxu0 0.0
  %504 = vmatpush.msra.mxu0 0.0
  %505 = vmatpush.msra.mxu0 %v34
  %506 = vmatpush.msra.mxu0 %v33
  %507 = vmatmul.f32.gmra.mxu0 %v489
  %v508 = vpop.f32.mrf.mxu0
  %v509 = vadd.f32 %v35, %v508
  %510 = vdwg.mxu0
  %v511 = vmul.f32 %v509, 0.5
  %v512 = vtanh.pop %v511
  %v513 = vmul.f32 %v512, 0.5
  %v514 = vadd.f32 %v513, 0.5
  %v515 = vtanh.pop %v509
  %v516 = vmul.f32 %v514, %v476
  %518 = vrot.lane.b32.xlu0 %v515, 80
  %v519 = vpop.permute.xlu0 %518
  %v521 = vmul.f32 %v514, %v519
  %523 = vrot.lane.b32.xlu0 %v521, 16
  %v524 = vpop.permute.xlu0 %523
  %v526 = vadd.f32 %v516, %v524
  %v527 = vtanh.pop %v526
  %529 = vrot.lane.b32.xlu0 %v527, 16
  %v530 = vpop.permute.xlu0 %529
  %v532 = vmul.f32 %v514, %v530
  %534 = vrot.lane.b32.xlu0 %v532, 96
  %v535 = vpop.permute.xlu0 %534
  %537 = vst.msk [vmem:[#allocation2 + $0x2] sm:$0x3] %vm487, %v535
  %v538 = vsel %vm37, %v535, 0
  %540 = vmatpush.msra.mxu0 0.0
  %541 = vmatpush.msra.mxu0 0.0
  %542 = vmatpush.msra.mxu0 0.0
  %543 = vmatpush.msra.mxu0 0.0
  %544 = vmatpush.msra.mxu0 0.0
  %545 = vmatpush.msra.mxu0 0.0
  %546 = vmatpush.msra.mxu0 0.0
  %547 = vmatpush.msra.mxu0 0.0
  %548 = vmatpush.msra.mxu0 0.0
  %549 = vmatpush.msra.mxu0 0.0
  %550 = vmatpush.msra.mxu0 0.0
  %551 = vmatpush.msra.mxu0 0.0
  %552 = vmatpush.msra.mxu0 0.0
  %553 = vmatpush.msra.mxu0 0.0
  %554 = vmatpush.msra.mxu0 %v34
  %555 = vmatpush.msra.mxu0 %v33
  %556 = vmatmul.f32.gmra.mxu0 %v538
  %v557 = vpop.f32.mrf.mxu0
  %v558 = vadd.f32 %v35, %v557
  %559 = vdwg.mxu0
  %v560 = vmul.f32 %v558, 0.5
  %v561 = vtanh.pop %v560
  %v562 = vmul.f32 %v561, 0.5
  %v563 = vadd.f32 %v562, 0.5
  %v564 = vtanh.pop %v558
  %v565 = vmul.f32 %v563, %v526
  %567 = vrot.lane.b32.xlu0 %v564, 80
  %v568 = vpop.permute.xlu0 %567
  %v570 = vmul.f32 %v563, %v568
  %572 = vrot.lane.b32.xlu0 %v570, 16
  %v573 = vpop.permute.xlu0 %572
  %v575 = vadd.f32 %v565, %v573
  %v576 = vtanh.pop %v575
  %578 = vrot.lane.b32.xlu0 %v576, 16
  %v579 = vpop.permute.xlu0 %578
  %v581 = vmul.f32 %v563, %v579
  %583 = vrot.lane.b32.xlu0 %v581, 96
  %v584 = vpop.permute.xlu0 %583
  %586 = vst.msk [vmem:[#allocation2 + $0x4] sm:$0x3] %vm487, %v584
  %v587 = vsel %vm37, %v584, 0
  %589 = vmatpush.msra.mxu0 0.0
  %590 = vmatpush.msra.mxu0 0.0
  %591 = vmatpush.msra.mxu0 0.0
  %592 = vmatpush.msra.mxu0 0.0
  %593 = vmatpush.msra.mxu0 0.0
  %594 = vmatpush.msra.mxu0 0.0
  %595 = vmatpush.msra.mxu0 0.0
  %596 = vmatpush.msra.mxu0 0.0
  %597 = vmatpush.msra.mxu0 0.0
  %598 = vmatpush.msra.mxu0 0.0
  %599 = vmatpush.msra.mxu0 0.0
  %600 = vmatpush.msra.mxu0 0.0
  %601 = vmatpush.msra.mxu0 0.0
  %602 = vmatpush.msra.mxu0 0.0
  %603 = vmatpush.msra.mxu0 %v34
  %604 = vmatpush.msra.mxu0 %v33
  %605 = vmatmul.f32.gmra.mxu0 %v587
  %v606 = vpop.f32.mrf.mxu0
  %v607 = vadd.f32 %v35, %v606
  %608 = vdwg.mxu0
  %v609 = vmul.f32 %v607, 0.5
  %v610 = vtanh.pop %v609
  %v611 = vmul.f32 %v610, 0.5
  %v612 = vadd.f32 %v611, 0.5
  %v613 = vtanh.pop %v607
  %v614 = vmul.f32 %v612, %v575
  %616 = vrot.lane.b32.xlu0 %v613, 80
  %v617 = vpop.permute.xlu0 %616
  %v619 = vmul.f32 %v612, %v617
  %621 = vrot.lane.b32.xlu0 %v619, 16
  %v622 = vpop.permute.xlu0 %621
  %v624 = vadd.f32 %v614, %v622
  %v625 = vtanh.pop %v624
  %627 = vrot.lane.b32.xlu0 %v625, 16
  %v628 = vpop.permute.xlu0 %627
  %v630 = vmul.f32 %v612, %v628
  %632 = vrot.lane.b32.xlu0 %v630, 96
  %v633 = vpop.permute.xlu0 %632
  %635 = vst.msk [vmem:[#allocation2 + $0x6] sm:$0x3] %vm487, %v633
  %v636 = vsel %vm37, %v633, 0
  %638 = vmatpush.msra.mxu0 0.0
  %639 = vmatpush.msra.mxu0 0.0
  %640 = vmatpush.msra.mxu0 0.0
  %641 = vmatpush.msra.mxu0 0.0
  %642 = vmatpush.msra.mxu0 0.0
  %643 = vmatpush.msra.mxu0 0.0
  %644 = vmatpush.msra.mxu0 0.0
  %645 = vmatpush.msra.mxu0 0.0
  %646 = vmatpush.msra.mxu0 0.0
  %647 = vmatpush.msra.mxu0 0.0
  %648 = vmatpush.msra.mxu0 0.0
  %649 = vmatpush.msra.mxu0 0.0
  %650 = vmatpush.msra.mxu0 0.0
  %651 = vmatpush.msra.mxu0 0.0
  %652 = vmatpush.msra.mxu0 %v34
  %653 = vmatpush.msra.mxu0 %v33
  %654 = vmatmul.f32.gmra.mxu0 %v636
  %v655 = vpop.f32.mrf.mxu0
  %v656 = vadd.f32 %v35, %v655
  %657 = vdwg.mxu0
  %v658 = vmul.f32 %v656, 0.5
  %v659 = vtanh.pop %v658
  %v660 = vmul.f32 %v659, 0.5
  %v661 = vadd.f32 %v660, 0.5
  %v662 = vtanh.pop %v656
  %v663 = vmul.f32 %v661, %v624
  %665 = vrot.lane.b32.xlu0 %v662, 80
  %v666 = vpop.permute.xlu0 %665
  %v668 = vmul.f32 %v661, %v666
  %670 = vrot.lane.b32.xlu0 %v668, 16
  %v671 = vpop.permute.xlu0 %670
  %v673 = vadd.f32 %v663, %v671
  %v674 = vtanh.pop %v673
  %676 = vrot.lane.b32.xlu0 %v674, 16
  %v677 = vpop.permute.xlu0 %676
  %v679 = vmul.f32 %v661, %v677
  %681 = vrot.lane.b32.xlu0 %v679, 96
  %v682 = vpop.permute.xlu0 %681
  %684 = vst.msk [vmem:[#allocation2 + $0x8] sm:$0x3] %vm487, %v682
  %v685 = vsel %vm37, %v682, 0
  %687 = vmatpush.msra.mxu0 0.0
  %688 = vmatpush.msra.mxu0 0.0
  %689 = vmatpush.msra.mxu0 0.0
  %690 = vmatpush.msra.mxu0 0.0
  %691 = vmatpush.msra.mxu0 0.0
  %692 = vmatpush.msra.mxu0 0.0
  %693 = vmatpush.msra.mxu0 0.0
  %694 = vmatpush.msra.mxu0 0.0
  %695 = vmatpush.msra.mxu0 0.0
  %696 = vmatpush.msra.mxu0 0.0
  %697 = vmatpush.msra.mxu0 0.0
  %698 = vmatpush.msra.mxu0 0.0
  %699 = vmatpush.msra.mxu0 0.0
  %700 = vmatpush.msra.mxu0 0.0
  %701 = vmatpush.msra.mxu0 %v34
  %702 = vmatpush.msra.mxu0 %v33
  %703 = vmatmul.f32.gmra.mxu0 %v685
  %v704 = vpop.f32.mrf.mxu0
  %v705 = vadd.f32 %v35, %v704
  %706 = vdwg.mxu0
  %v707 = vmul.f32 %v705, 0.5
  %v708 = vtanh.pop %v707
  %v709 = vmul.f32 %v708, 0.5
  %v710 = vadd.f32 %v709, 0.5
  %v711 = vtanh.pop %v705
  %v712 = vmul.f32 %v710, %v673
  %714 = vrot.lane.b32.xlu0 %v711, 80
  %v715 = vpop.permute.xlu0 %714
  %v717 = vmul.f32 %v710, %v715
  %719 = vrot.lane.b32.xlu0 %v717, 16
  %v720 = vpop.permute.xlu0 %719
  %v722 = vadd.f32 %v712, %v720
  %v723 = vtanh.pop %v722
  %725 = vrot.lane.b32.xlu0 %v723, 16
  %v726 = vpop.permute.xlu0 %725
  %v728 = vmul.f32 %v710, %v726
  %730 = vrot.lane.b32.xlu0 %v728, 96
  %v731 = vpop.permute.xlu0 %730
  %733 = vst.msk [vmem:[#allocation2 + $0xa] sm:$0x3] %vm487, %v731
  %v734 = vsel %vm37, %v731, 0
  %736 = vmatpush.msra.mxu0 0.0
  %737 = vmatpush.msra.mxu0 0.0
  %738 = vmatpush.msra.mxu0 0.0
  %739 = vmatpush.msra.mxu0 0.0
  %740 = vmatpush.msra.mxu0 0.0
  %741 = vmatpush.msra.mxu0 0.0
  %742 = vmatpush.msra.mxu0 0.0
  %743 = vmatpush.msra.mxu0 0.0
  %744 = vmatpush.msra.mxu0 0.0
  %745 = vmatpush.msra.mxu0 0.0
  %746 = vmatpush.msra.mxu0 0.0
  %747 = vmatpush.msra.mxu0 0.0
  %748 = vmatpush.msra.mxu0 0.0
  %749 = vmatpush.msra.mxu0 0.0
  %750 = vmatpush.msra.mxu0 %v34
  %751 = vmatpush.msra.mxu0 %v33
  %752 = vmatmul.f32.gmra.mxu0 %v734
  %v753 = vpop.f32.mrf.mxu0
  %v754 = vadd.f32 %v35, %v753
  %755 = vdwg.mxu0
  %v756 = vmul.f32 %v754, 0.5
  %v757 = vtanh.pop %v756
  %v758 = vmul.f32 %v757, 0.5
  %v759 = vadd.f32 %v758, 0.5
  %v760 = vtanh.pop %v754
  %v761 = vmul.f32 %v759, %v722
  %763 = vrot.lane.b32.xlu0 %v760, 80
  %v764 = vpop.permute.xlu0 %763
  %v766 = vmul.f32 %v759, %v764
  %768 = vrot.lane.b32.xlu0 %v766, 16
  %v769 = vpop.permute.xlu0 %768
  %v771 = vadd.f32 %v761, %v769
  %v772 = vtanh.pop %v771
  %774 = vrot.lane.b32.xlu0 %v772, 16
  %v775 = vpop.permute.xlu0 %774
  %v777 = vmul.f32 %v759, %v775
  %779 = vrot.lane.b32.xlu0 %v777, 96
  %v780 = vpop.permute.xlu0 %779
  %782 = vst.msk [vmem:[#allocation2 + $0xc] sm:$0x3] %vm487, %v780
  %v783 = vsel %vm37, %v780, 0
  %785 = vmatpush.msra.mxu0 0.0
  %786 = vmatpush.msra.mxu0 0.0
  %787 = vmatpush.msra.mxu0 0.0
  %788 = vmatpush.msra.mxu0 0.0
  %789 = vmatpush.msra.mxu0 0.0
  %790 = vmatpush.msra.mxu0 0.0
  %791 = vmatpush.msra.mxu0 0.0
  %792 = vmatpush.msra.mxu0 0.0
  %793 = vmatpush.msra.mxu0 0.0
  %794 = vmatpush.msra.mxu0 0.0
  %795 = vmatpush.msra.mxu0 0.0
  %796 = vmatpush.msra.mxu0 0.0
  %797 = vmatpush.msra.mxu0 0.0
  %798 = vmatpush.msra.mxu0 0.0
  %799 = vmatpush.msra.mxu0 %v34
  %800 = vmatpush.msra.mxu0 %v33
  %801 = vmatmul.f32.gmra.mxu0 %v783
  %v802 = vpop.f32.mrf.mxu0
  %v803 = vadd.f32 %v35, %v802
  %804 = vdwg.mxu0
  %v805 = vmul.f32 %v803, 0.5
  %v806 = vtanh.pop %v805
  %v807 = vmul.f32 %v806, 0.5
  %v808 = vadd.f32 %v807, 0.5
  %v809 = vtanh.pop %v803
  %v810 = vmul.f32 %v808, %v771
  %812 = vrot.lane.b32.xlu0 %v809, 80
  %v813 = vpop.permute.xlu0 %812
  %v815 = vmul.f32 %v808, %v813
  %817 = vrot.lane.b32.xlu0 %v815, 16
  %v818 = vpop.permute.xlu0 %817
  %v820 = vadd.f32 %v810, %v818
  %v821 = vtanh.pop %v820
  %823 = vrot.lane.b32.xlu0 %v821, 16
  %v824 = vpop.permute.xlu0 %823
  %v826 = vmul.f32 %v808, %v824
  %828 = vrot.lane.b32.xlu0 %v826, 96
  %v829 = vpop.permute.xlu0 %828
  %831 = vst.msk [vmem:[#allocation2 + $0xe] sm:$0x3] %vm487, %v829
  %v832 = vsel %vm37, %v829, 0
  %834 = vmatpush.msra.mxu0 0.0
  %835 = vmatpush.msra.mxu0 0.0
  %836 = vmatpush.msra.mxu0 0.0
  %837 = vmatpush.msra.mxu0 0.0
  %838 = vmatpush.msra.mxu0 0.0
  %839 = vmatpush.msra.mxu0 0.0
  %840 = vmatpush.msra.mxu0 0.0
  %841 = vmatpush.msra.mxu0 0.0
  %842 = vmatpush.msra.mxu0 0.0
  %843 = vmatpush.msra.mxu0 0.0
  %844 = vmatpush.msra.mxu0 0.0
  %845 = vmatpush.msra.mxu0 0.0
  %846 = vmatpush.msra.mxu0 0.0
  %847 = vmatpush.msra.mxu0 0.0
  %848 = vmatpush.msra.mxu0 %v34
  %849 = vmatpush.msra.mxu0 %v33
  %850 = vmatmul.f32.gmra.mxu0 %v832
  %v851 = vpop.f32.mrf.mxu0
  %v852 = vadd.f32 %v35, %v851
  %853 = vdwg.mxu0
  %v854 = vmul.f32 %v852, 0.5
  %v855 = vtanh.pop %v854
  %v856 = vmul.f32 %v855, 0.5
  %v857 = vadd.f32 %v856, 0.5
  %v858 = vtanh.pop %v852
  %v859 = vmul.f32 %v857, %v820
  %861 = vrot.lane.b32.xlu0 %v858, 80
  %v862 = vpop.permute.xlu0 %861
  %v864 = vmul.f32 %v857, %v862
  %866 = vrot.lane.b32.xlu0 %v864, 16
  %v867 = vpop.permute.xlu0 %866
  %v869 = vadd.f32 %v859, %v867
  %v870 = vtanh.pop %v869
  %872 = vrot.lane.b32.xlu0 %v870, 16
  %v873 = vpop.permute.xlu0 %872
  %v875 = vmul.f32 %v857, %v873
  %877 = vrot.lane.b32.xlu0 %v875, 96
  %v878 = vpop.permute.xlu0 %877
  %880 = vst.msk [vmem:[#allocation2 + $0x10] sm:$0x3] %vm487, %v878
  %v881 = vsel %vm37, %v878, 0
  %883 = vmatpush.msra.mxu0 0.0
  %884 = vmatpush.msra.mxu0 0.0
  %885 = vmatpush.msra.mxu0 0.0
  %886 = vmatpush.msra.mxu0 0.0
  %887 = vmatpush.msra.mxu0 0.0
  %888 = vmatpush.msra.mxu0 0.0
  %889 = vmatpush.msra.mxu0 0.0
  %890 = vmatpush.msra.mxu0 0.0
  %891 = vmatpush.msra.mxu0 0.0
  %892 = vmatpush.msra.mxu0 0.0
  %893 = vmatpush.msra.mxu0 0.0
  %894 = vmatpush.msra.mxu0 0.0
  %895 = vmatpush.msra.mxu0 0.0
  %896 = vmatpush.msra.mxu0 0.0
  %897 = vmatpush.msra.mxu0 %v34
  %898 = vmatpush.msra.mxu0 %v33
  %899 = vmatmul.f32.gmra.mxu0 %v881
  %v900 = vpop.f32.mrf.mxu0
  %v901 = vadd.f32 %v35, %v900
  %902 = vdwg.mxu0
  %v903 = vmul.f32 %v901, 0.5
  %v904 = vtanh.pop %v903
  %v905 = vmul.f32 %v904, 0.5
  %v906 = vadd.f32 %v905, 0.5
  %v907 = vtanh.pop %v901
  %v908 = vmul.f32 %v906, %v869
  %910 = vrot.lane.b32.xlu0 %v907, 80
  %v911 = vpop.permute.xlu0 %910
  %v913 = vmul.f32 %v906, %v911
  %915 = vrot.lane.b32.xlu0 %v913, 16
  %v916 = vpop.permute.xlu0 %915
  %v918 = vadd.f32 %v908, %v916
  %v919 = vtanh.pop %v918
  %921 = vrot.lane.b32.xlu0 %v919, 16
  %v922 = vpop.permute.xlu0 %921
  %v924 = vmul.f32 %v906, %v922
  %926 = vrot.lane.b32.xlu0 %v924, 96
  %v927 = vpop.permute.xlu0 %926
  %929 = vst.msk [vmem:[#allocation2 + $0x12] sm:$0x3] %vm487, %v927
  %v930 = vsel %vm37, %v927, 0
  %932 = vmatpush.msra.mxu0 0.0
  %933 = vmatpush.msra.mxu0 0.0
  %934 = vmatpush.msra.mxu0 0.0
  %935 = vmatpush.msra.mxu0 0.0
  %936 = vmatpush.msra.mxu0 0.0
  %937 = vmatpush.msra.mxu0 0.0
  %938 = vmatpush.msra.mxu0 0.0
  %939 = vmatpush.msra.mxu0 0.0
  %940 = vmatpush.msra.mxu0 0.0
  %941 = vmatpush.msra.mxu0 0.0
  %942 = vmatpush.msra.mxu0 0.0
  %943 = vmatpush.msra.mxu0 0.0
  %944 = vmatpush.msra.mxu0 0.0
  %945 = vmatpush.msra.mxu0 0.0
  %946 = vmatpush.msra.mxu0 %v34
  %947 = vmatpush.msra.mxu0 %v33
  %948 = vmatmul.f32.gmra.mxu0 %v930
  %v949 = vpop.f32.mrf.mxu0
  %v950 = vadd.f32 %v35, %v949
  %951 = vdwg.mxu0
  %v952 = vmul.f32 %v950, 0.5
  %v953 = vtanh.pop %v952
  %v954 = vmul.f32 %v953, 0.5
  %v955 = vadd.f32 %v954, 0.5
  %v956 = vtanh.pop %v950
  %v957 = vmul.f32 %v955, %v918
  %959 = vrot.lane.b32.xlu0 %v956, 80
  %v960 = vpop.permute.xlu0 %959
  %v962 = vmul.f32 %v955, %v960
  %964 = vrot.lane.b32.xlu0 %v962, 16
  %v965 = vpop.permute.xlu0 %964
  %v967 = vadd.f32 %v957, %v965
  %v968 = vtanh.pop %v967
  %970 = vrot.lane.b32.xlu0 %v968, 16
  %v971 = vpop.permute.xlu0 %970
  %v973 = vmul.f32 %v955, %v971
  %975 = vrot.lane.b32.xlu0 %v973, 96
  %v976 = vpop.permute.xlu0 %975
  %978 = vst.msk [vmem:[#allocation2 + $0x14] sm:$0x3] %vm487, %v976
  %v979 = vsel %vm37, %v976, 0
  %981 = vmatpush.msra.mxu0 0.0
  %982 = vmatpush.msra.mxu0 0.0
  %983 = vmatpush.msra.mxu0 0.0
  %984 = vmatpush.msra.mxu0 0.0
  %985 = vmatpush.msra.mxu0 0.0
  %986 = vmatpush.msra.mxu0 0.0
  %987 = vmatpush.msra.mxu0 0.0
  %988 = vmatpush.msra.mxu0 0.0
  %989 = vmatpush.msra.mxu0 0.0
  %990 = vmatpush.msra.mxu0 0.0
  %991 = vmatpush.msra.mxu0 0.0
  %992 = vmatpush.msra.mxu0 0.0
  %993 = vmatpush.msra.mxu0 0.0
  %994 = vmatpush.msra.mxu0 0.0
  %995 = vmatpush.msra.mxu0 %v34
  %996 = vmatpush.msra.mxu0 %v33
  %997 = vmatmul.f32.gmra.mxu0 %v979
  %v998 = vpop.f32.mrf.mxu0
  %v999 = vadd.f32 %v35, %v998
  %1000 = vdwg.mxu0
  %v1001 = vmul.f32 %v999, 0.5
  %v1002 = vtanh.pop %v1001
  %v1003 = vmul.f32 %v1002, 0.5
  %v1004 = vadd.f32 %v1003, 0.5
  %v1005 = vtanh.pop %v999
  %v1006 = vmul.f32 %v1004, %v967
  %1008 = vrot.lane.b32.xlu0 %v1005, 80
  %v1009 = vpop.permute.xlu0 %1008
  %v1011 = vmul.f32 %v1004, %v1009
  %1013 = vrot.lane.b32.xlu0 %v1011, 16
  %v1014 = vpop.permute.xlu0 %1013
  %v1016 = vadd.f32 %v1006, %v1014
  %v1017 = vtanh.pop %v1016
  %1019 = vrot.lane.b32.xlu0 %v1017, 16
  %v1020 = vpop.permute.xlu0 %1019
  %v1022 = vmul.f32 %v1004, %v1020
  %1024 = vrot.lane.b32.xlu0 %v1022, 96
  %v1025 = vpop.permute.xlu0 %1024
  %1027 = vst.msk [vmem:[#allocation2 + $0x16] sm:$0x3] %vm487, %v1025
  %v1028 = vsel %vm37, %v1025, 0
  %1030 = vmatpush.msra.mxu0 0.0
  %1031 = vmatpush.msra.mxu0 0.0
  %1032 = vmatpush.msra.mxu0 0.0
  %1033 = vmatpush.msra.mxu0 0.0
  %1034 = vmatpush.msra.mxu0 0.0
  %1035 = vmatpush.msra.mxu0 0.0
  %1036 = vmatpush.msra.mxu0 0.0
  %1037 = vmatpush.msra.mxu0 0.0
  %1038 = vmatpush.msra.mxu0 0.0
  %1039 = vmatpush.msra.mxu0 0.0
  %1040 = vmatpush.msra.mxu0 0.0
  %1041 = vmatpush.msra.mxu0 0.0
  %1042 = vmatpush.msra.mxu0 0.0
  %1043 = vmatpush.msra.mxu0 0.0
  %1044 = vmatpush.msra.mxu0 %v34
  %1045 = vmatpush.msra.mxu0 %v33
  %1046 = vmatmul.f32.gmra.mxu0 %v1028
  %v1047 = vpop.f32.mrf.mxu0
  %v1048 = vadd.f32 %v35, %v1047
  %1049 = vdwg.mxu0
  %v1050 = vmul.f32 %v1048, 0.5
  %v1051 = vtanh.pop %v1050
  %v1052 = vmul.f32 %v1051, 0.5
  %v1053 = vadd.f32 %v1052, 0.5
  %v1054 = vtanh.pop %v1048
  %v1055 = vmul.f32 %v1053, %v1016
  %1057 = vrot.lane.b32.xlu0 %v1054, 80
  %v1058 = vpop.permute.xlu0 %1057
  %v1060 = vmul.f32 %v1053, %v1058
  %1062 = vrot.lane.b32.xlu0 %v1060, 16
  %v1063 = vpop.permute.xlu0 %1062
  %v1065 = vadd.f32 %v1055, %v1063
  %v1066 = vtanh.pop %v1065
  %1068 = vrot.lane.b32.xlu0 %v1066, 16
  %v1069 = vpop.permute.xlu0 %1068
  %v1071 = vmul.f32 %v1053, %v1069
  %1073 = vrot.lane.b32.xlu0 %v1071, 96
  %v1074 = vpop.permute.xlu0 %1073
  %1076 = vst.msk [vmem:[#allocation2 + $0x18] sm:$0x3] %vm487, %v1074
  %v1077 = vsel %vm37, %v1074, 0
  %1079 = vmatpush.msra.mxu0 0.0
  %1080 = vmatpush.msra.mxu0 0.0
  %1081 = vmatpush.msra.mxu0 0.0
  %1082 = vmatpush.msra.mxu0 0.0
  %1083 = vmatpush.msra.mxu0 0.0
  %1084 = vmatpush.msra.mxu0 0.0
  %1085 = vmatpush.msra.mxu0 0.0
  %1086 = vmatpush.msra.mxu0 0.0
  %1087 = vmatpush.msra.mxu0 0.0
  %1088 = vmatpush.msra.mxu0 0.0
  %1089 = vmatpush.msra.mxu0 0.0
  %1090 = vmatpush.msra.mxu0 0.0
  %1091 = vmatpush.msra.mxu0 0.0
  %1092 = vmatpush.msra.mxu0 0.0
  %1093 = vmatpush.msra.mxu0 %v34
  %1094 = vmatpush.msra.mxu0 %v33
  %1095 = vmatmul.f32.gmra.mxu0 %v1077
  %v1096 = vpop.f32.mrf.mxu0
  %v1097 = vadd.f32 %v35, %v1096
  %1098 = vdwg.mxu0
  %v1099 = vmul.f32 %v1097, 0.5
  %v1100 = vtanh.pop %v1099
  %v1101 = vmul.f32 %v1100, 0.5
  %v1102 = vadd.f32 %v1101, 0.5
  %v1103 = vtanh.pop %v1097
  %v1104 = vmul.f32 %v1102, %v1065
  %1106 = vrot.lane.b32.xlu0 %v1103, 80
  %v1107 = vpop.permute.xlu0 %1106
  %v1109 = vmul.f32 %v1102, %v1107
  %1111 = vrot.lane.b32.xlu0 %v1109, 16
  %v1112 = vpop.permute.xlu0 %1111
  %v1114 = vadd.f32 %v1104, %v1112
  %v1115 = vtanh.pop %v1114
  %1117 = vrot.lane.b32.xlu0 %v1115, 16
  %v1118 = vpop.permute.xlu0 %1117
  %v1120 = vmul.f32 %v1102, %v1118
  %1122 = vrot.lane.b32.xlu0 %v1120, 96
  %v1123 = vpop.permute.xlu0 %1122
  %1125 = vst.msk [vmem:[#allocation2 + $0x1a] sm:$0x3] %vm487, %v1123
  %v1126 = vsel %vm37, %v1123, 0
  %1128 = vmatpush.msra.mxu0 0.0
  %1129 = vmatpush.msra.mxu0 0.0
  %1130 = vmatpush.msra.mxu0 0.0
  %1131 = vmatpush.msra.mxu0 0.0
  %1132 = vmatpush.msra.mxu0 0.0
  %1133 = vmatpush.msra.mxu0 0.0
  %1134 = vmatpush.msra.mxu0 0.0
  %1135 = vmatpush.msra.mxu0 0.0
  %1136 = vmatpush.msra.mxu0 0.0
  %1137 = vmatpush.msra.mxu0 0.0
  %1138 = vmatpush.msra.mxu0 0.0
  %1139 = vmatpush.msra.mxu0 0.0
  %1140 = vmatpush.msra.mxu0 0.0
  %1141 = vmatpush.msra.mxu0 0.0
  %1142 = vmatpush.msra.mxu0 %v34
  %1143 = vmatpush.msra.mxu0 %v33
  %1144 = vmatmul.f32.gmra.mxu0 %v1126
  %v1145 = vpop.f32.mrf.mxu0
  %v1146 = vadd.f32 %v35, %v1145
  %1147 = vdwg.mxu0
  %v1148 = vmul.f32 %v1146, 0.5
  %v1149 = vtanh.pop %v1148
  %v1150 = vmul.f32 %v1149, 0.5
  %v1151 = vadd.f32 %v1150, 0.5
  %v1152 = vtanh.pop %v1146
  %v1153 = vmul.f32 %v1151, %v1114
  %1155 = vrot.lane.b32.xlu0 %v1152, 80
  %v1156 = vpop.permute.xlu0 %1155
  %v1158 = vmul.f32 %v1151, %v1156
  %1160 = vrot.lane.b32.xlu0 %v1158, 16
  %v1161 = vpop.permute.xlu0 %1160
  %v1163 = vadd.f32 %v1153, %v1161
  %v1164 = vtanh.pop %v1163
  %1166 = vrot.lane.b32.xlu0 %v1164, 16
  %v1167 = vpop.permute.xlu0 %1166
  %v1169 = vmul.f32 %v1151, %v1167
  %1171 = vrot.lane.b32.xlu0 %v1169, 96
  %v1172 = vpop.permute.xlu0 %1171
  %1174 = vst.msk [vmem:[#allocation2 + $0x1c] sm:$0x3] %vm487, %v1172
  %v1175 = vld [vmem:[#allocation2] sm:$0xff]
  %v1176 = vld [vmem:[#allocation2 + $0x8] sm:$0xff]
  %v1177 = vld [vmem:[#allocation2 + $0x10] sm:$0xff]
  %v1178 = vld [vmem:[#allocation2 + $0x18] sm:$0x3f]
  %v1179 = vld [vmem:[%s6] sm:$0xff]
  %v1180 = vld [vmem:[%s6 + $0x8] sm:$0xff]
  %v1181 = vld [vmem:[%s7] sm:$0xff]
  %v1182 = vld [vmem:[%s7 + $0x8] sm:$0xff]
  %v1183 = vld [vmem:[%s7 + $0x10] sm:$0xff]
  %v1184 = vld [vmem:[%s7 + $0x18] sm:$0x3f]
  %v1186 = vsel %vm37, %v1175, 0
  %v1189 = vsel %vm37, %v1176, 0
  %v1192 = vsel %vm37, %v1177, 0
  %v1195 = vsel %vm37, %v1178, 0
  %1197 = vmatpush.msra.mxu0 0.0
  %1198 = vmatpush.msra.mxu0 0.0
  %1199 = vmatpush.msra.mxu0 0.0
  %1200 = vmatpush.msra.mxu0 0.0
  %1201 = vmatpush.msra.mxu0 0.0
  %1202 = vmatpush.msra.mxu0 0.0
  %1203 = vmatpush.msra.mxu0 0.0
  %1204 = vmatpush.msra.mxu0 0.0
  %1205 = vmatpush.msra.mxu0 0.0
  %1206 = vmatpush.msra.mxu0 0.0
  %1207 = vmatpush.msra.mxu0 0.0
  %1208 = vmatpush.msra.mxu0 0.0
  %1209 = vmatpush.msra.mxu0 0.0
  %1210 = vmatpush.msra.mxu0 0.0
  %1211 = vmatpush.msra.mxu0 %v1180
  %1212 = vmatpush.msra.mxu0 %v1179
  %1213 = vmatmul.f32.gmra.mxu0 %v1186
  %v1214 = vpop.f32.mrf.mxu0
  %v1215 = vadd.f32 %v1181, %v1214
  %1216 = vmatmul.f32.gmra.mxu0 %v1189
  %v1217 = vpop.f32.mrf.mxu0
  %v1218 = vadd.f32 %v1182, %v1217
  %1219 = vmatmul.f32.gmra.mxu0 %v1192
  %v1220 = vpop.f32.mrf.mxu0
  %v1221 = vadd.f32 %v1183, %v1220
  %1222 = vmatmul.f32.gmra.mxu0 %v1195
  %v1223 = vpop.f32.mrf.mxu0
  %v1224 = vadd.f32 %v1184, %v1223
  %1225 = vdwg.mxu0
  %vm1226 = vcmask 277504
  %1227 = vst.msk [vmem:[%s8] sm:$0xff] %vm1226, %v1215
  %1228 = vst.msk [vmem:[%s8 + $0x8] sm:$0xff] %vm1226, %v1218
  %1229 = vst.msk [vmem:[%s8 + $0x10] sm:$0xff] %vm1226, %v1221
  %vm1230 = vcmask 275456
  %1231 = vst.msk [vmem:[%s8 + $0x18] sm:$0x3f] %vm1230, %v1224
  // Predicated region
  $region34: #{lstm_forward.1} parent=0 // pred_check
    _
  $region35: #{lstm_forward.1} parent=0 // pred_check_branch
    %1233 = sbr.rel (0) target = $region37
  $region36: #{lstm_forward.1} parent=0 // pred_region
    _
  $region37: #{lstm_forward.1} parent=0 // pred_fallthru
    _
  // Predicated region
  $region38: #{lstm_forward.1} parent=0 // pred_check
    _
  $region39: #{lstm_forward.1} parent=0 // pred_check_branch
    %1235 = sbr.rel (0) target = $region41
  $region40: #{lstm_forward.1} parent=0 // pred_region
    _
  $region41: #{lstm_forward.1} parent=0 // pred_fallthru
    _

</llo_original>
